<compile_context>
chip_gen: v7x
topology: tpu7x:2x2x1
jax: 0.10.0
libtpu: 0.0.40
codegen_flags: <defaults>
</compile_context>

<pallas_src>
import functools

import jax
import jax.numpy as jnp
from jax.experimental import pallas as pl
from jax.experimental.pallas import tpu as pltpu

NET_CHANNELS = (64, 128, 128, 128, 256, 256)
LANE = 128
SUBLANE_BF16 = 16   # bf16 packs 2 rows per sublane -> keep row tiles % 16
MAX_TILE_B = 2048   # big enough to amortize per-step overhead, small vs VMEM


def _round_up(x, m):
    return (x + m - 1) // m * m


def _fcnet_fused_kernel(*refs, num_layers):
    """refs = (x_ref, w1, b1, ..., wL, bL, o_ref).

    Chains all L Linear layers in one body: bf16 matmuls on the MXU with f32
    accumulation, bias + ReLU epilogue in f32, re-cast to bf16 to feed the
    next layer / the final store.  ReLU is skipped on the classifier layer.
    """
    x_ref = refs[0]
    o_ref = refs[-1]
    wb = refs[1:-1]

    h = x_ref[...]                       # bf16 (tile_b, Kp)
    for li in range(num_layers):
        w_ref = wb[2 * li]               # bf16 (K_pad, N_pad)
        b_ref = wb[2 * li + 1]           # f32  (1, N_pad)
        y = jnp.dot(h, w_ref[...], preferred_element_type=jnp.float32)
        y = y + b_ref[...]
        if li < num_layers - 1:
            y = jnp.maximum(y, 0.0)
            # dropout -> identity (eval semantics), see TODO above.
        h = y.astype(jnp.bfloat16)
    o_ref[...] = h.astype(o_ref.dtype)


def init_fcnet_params(key, in_resolution, in_channels, num_classes):
    """Deterministic synthetic parameters matching FCNet.__init__ shapes.

    Returns a list of (w_pad_bf16 (K_pad, N_pad), b_pad_f32 (1, N_pad)) with
    K/N zero-padded to multiples of 128 lanes.  PyTorch Linear weight is
    (out, in); we store it transposed (in, out).
    """
    dims = [in_channels * in_resolution ** 2] + list(NET_CHANNELS) + [num_classes]
    params = []
    for li in range(len(dims) - 1):
        k, n = dims[li], dims[li + 1]
        kp, np_ = _round_up(k, LANE), _round_up(n, LANE)
        key, kw, kb = jax.random.split(key, 3)
        w = jax.random.normal(kw, (n, k), jnp.float32) * 0.01
        b = jax.random.normal(kb, (n,), jnp.float32) * 0.01
        w_pad = jnp.zeros((kp, np_), jnp.float32).at[:k, :n].set(w.T)
        b_pad = jnp.zeros((1, np_), jnp.float32).at[0, :n].set(b)
        params.append((w_pad.astype(jnp.bfloat16), b_pad))
    return params


def _choose_tile_b(B):
    """Row tile for the batch grid.

    * multiple of 16 rows (bf16 sublane packing, also satisfies f32's 8)
    * <= MAX_TILE_B rows (amortizes ~0.35us/step, stays well inside VMEM
      even on v7x's 64 MiB)
    * >= 2 grid steps once the batch is non-tiny so the "parallel" axis
      shards across v7x's two TensorCores (costs v5e/v6e one extra cheap step).
    """
    b16 = _round_up(max(B, 1), SUBLANE_BF16)
    if b16 <= 2 * SUBLANE_BF16:
        return b16
    half = _round_up((b16 + 1) // 2, SUBLANE_BF16)
    return min(MAX_TILE_B, half)


def fcnet_forward(x_nchw, params, num_classes):
    B = x_nchw.shape[0]
    x = x_nchw.reshape(B, -1)            # == torch x.view(B, -1)
    K = x.shape[1]
    Kp = params[0][0].shape[0]
    Np_out = params[-1][0].shape[1]
    num_layers = len(params)

    tile_b = _choose_tile_b(B)
    Bp = _round_up(B, tile_b)

    # Stream the input as bf16 (the kernel's dominant HBM stream).  Skip the
    # extra padded copy entirely when shapes already align; otherwise fuse
    # pad + cast into one wrapper op.
    if Bp == B and Kp == K:
        x_in = x.astype(jnp.bfloat16)
    else:
        x_in = (jnp.zeros((Bp, Kp), jnp.bfloat16)
                .at[:B, :K].set(x.astype(jnp.bfloat16)))

    kernel = functools.partial(_fcnet_fused_kernel, num_layers=num_layers)

    in_specs = [pl.BlockSpec((tile_b, Kp), lambda i: (i, 0))]
    flat_inputs = [x_in]
    for (w, b) in params:
        kp, np_ = w.shape
        # Constant index_map -> weights/biases stay VMEM-resident across the
        # batch grid (no re-DMA between consecutive steps).
        in_specs.append(pl.BlockSpec((kp, np_), lambda i: (0, 0)))
        in_specs.append(pl.BlockSpec((1, np_), lambda i: (0, 0)))
        flat_inputs += [w, b]

    flops = 2 * Bp * sum(w.shape[0] * w.shape[1] for (w, _) in params)
    bytes_accessed = (x_in.size * 2 + Bp * Np_out * 2
                      + sum(w.size * 2 + b.size * 4 for (w, b) in params))

    out = pl.pallas_call(
        kernel,
        out_shape=jax.ShapeDtypeStruct((Bp, Np_out), jnp.bfloat16),
        grid=(Bp // tile_b,),
        in_specs=in_specs,
        out_specs=pl.BlockSpec((tile_b, Np_out), lambda i: (i, 0)),
        compiler_params=pltpu.CompilerParams(
            dimension_semantics=("parallel",)),
        cost_estimate=pl.CostEstimate(
            flops=flops, transcendentals=0, bytes_accessed=bytes_accessed),
    )(*flat_inputs)

    return out[:B, :num_classes].astype(jnp.float32)


if __name__ == "__main__":
    # Small, FCNet-consistent shapes: batch=2, channels=3, resolution=16.
    B, C, R, NUM_CLASSES = 2, 3, 16, 10
    key = jax.random.PRNGKey(0)
    key_x, key_p = jax.random.split(key)
    x = jax.random.normal(key_x, (B, C, R, R), jnp.float32)

    params = init_fcnet_params(key_p, in_resolution=R, in_channels=C,
                               num_classes=NUM_CLASSES)

    logits = fcnet_forward(x, params, NUM_CLASSES)
    logits = jax.block_until_ready(logits)
    assert logits.shape == (B, NUM_CLASSES), logits.shape
    print("KERNEL_OK")
</pallas_src>

<mosaic_0001>
module attributes {stable_mosaic.version = 11 : i64} {
  func.func @_fcnet_fused_kernel(%arg0: i32, %arg1: memref<16x768xbf16, #tpu.memory_space<vmem>>, %arg2: memref<768x128xbf16, #tpu.memory_space<vmem>>, %arg3: memref<1x128xf32, #tpu.memory_space<vmem>>, %arg4: memref<128x128xbf16, #tpu.memory_space<vmem>>, %arg5: memref<1x128xf32, #tpu.memory_space<vmem>>, %arg6: memref<128x128xbf16, #tpu.memory_space<vmem>>, %arg7: memref<1x128xf32, #tpu.memory_space<vmem>>, %arg8: memref<128x128xbf16, #tpu.memory_space<vmem>>, %arg9: memref<1x128xf32, #tpu.memory_space<vmem>>, %arg10: memref<128x256xbf16, #tpu.memory_space<vmem>>, %arg11: memref<1x256xf32, #tpu.memory_space<vmem>>, %arg12: memref<256x256xbf16, #tpu.memory_space<vmem>>, %arg13: memref<1x256xf32, #tpu.memory_space<vmem>>, %arg14: memref<256x128xbf16, #tpu.memory_space<vmem>>, %arg15: memref<1x128xf32, #tpu.memory_space<vmem>>, %arg16: memref<16x128xbf16, #tpu.memory_space<vmem>>) attributes {dimension_semantics = [#tpu.dimension_semantics<parallel>], iteration_bounds = array<i64: 1>, scalar_prefetch = 0 : i64, scratch_operands = 0 : i64, tpu.core_type = #tpu.core_type<tc>, window_params = [{transform_indices = @transform_0, window_bounds = array<i64: 16, 768>}, {pipeline_mode = #tpu.pipeline_mode<synchronous>, transform_indices = @transform_1, window_bounds = array<i64: 768, 128>}, {pipeline_mode = #tpu.pipeline_mode<synchronous>, transform_indices = @transform_2, window_bounds = array<i64: 1, 128>}, {pipeline_mode = #tpu.pipeline_mode<synchronous>, transform_indices = @transform_3, window_bounds = array<i64: 128, 128>}, {pipeline_mode = #tpu.pipeline_mode<synchronous>, transform_indices = @transform_4, window_bounds = array<i64: 1, 128>}, {pipeline_mode = #tpu.pipeline_mode<synchronous>, transform_indices = @transform_5, window_bounds = array<i64: 128, 128>}, {pipeline_mode = #tpu.pipeline_mode<synchronous>, transform_indices = @transform_6, window_bounds = array<i64: 1, 128>}, {pipeline_mode = #tpu.pipeline_mode<synchronous>, transform_indices = @transform_7, window_bounds = array<i64: 128, 128>}, {pipeline_mode = #tpu.pipeline_mode<synchronous>, transform_indices = @transform_8, window_bounds = array<i64: 1, 128>}, {pipeline_mode = #tpu.pipeline_mode<synchronous>, transform_indices = @transform_9, window_bounds = array<i64: 128, 256>}, {pipeline_mode = #tpu.pipeline_mode<synchronous>, transform_indices = @transform_10, window_bounds = array<i64: 1, 256>}, {pipeline_mode = #tpu.pipeline_mode<synchronous>, transform_indices = @transform_11, window_bounds = array<i64: 256, 256>}, {pipeline_mode = #tpu.pipeline_mode<synchronous>, transform_indices = @transform_12, window_bounds = array<i64: 1, 256>}, {pipeline_mode = #tpu.pipeline_mode<synchronous>, transform_indices = @transform_13, window_bounds = array<i64: 256, 128>}, {pipeline_mode = #tpu.pipeline_mode<synchronous>, transform_indices = @transform_14, window_bounds = array<i64: 1, 128>}, {transform_indices = @transform_15, window_bounds = array<i64: 16, 128>}]} {
    %c0 = arith.constant 0 : index
    %c0_0 = arith.constant 0 : index
    %0 = vector.load %arg1[%c0, %c0_0] : memref<16x768xbf16, #tpu.memory_space<vmem>>, vector<16x768xbf16>
    %c0_1 = arith.constant 0 : index
    %c0_2 = arith.constant 0 : index
    %1 = vector.load %arg2[%c0_1, %c0_2] : memref<768x128xbf16, #tpu.memory_space<vmem>>, vector<768x128xbf16>
    %cst = arith.constant dense<0.000000e+00> : vector<16x128xf32>
    %2 = tpu.matmul %0, %1, %cst {dimension_numbers = #tpu.dot_dimension_numbers<[1], [0], [0], [1], [0, 0, 1, 1], [], []>} : vector<16x768xbf16>, vector<768x128xbf16>, vector<16x128xf32> -> vector<16x128xf32>
    %c0_3 = arith.constant 0 : index
    %c0_4 = arith.constant 0 : index
    %3 = vector.load %arg3[%c0_3, %c0_4] : memref<1x128xf32, #tpu.memory_space<vmem>>, vector<1x128xf32>
    %4 = vector.broadcast %3 : vector<1x128xf32> to vector<16x128xf32>
    %5 = arith.addf %2, %4 : vector<16x128xf32>
    %cst_5 = arith.constant 0.000000e+00 : f32
    %6 = vector.broadcast %cst_5 : f32 to vector<16x128xf32>
    %7 = arith.maximumf %5, %6 : vector<16x128xf32>
    %8 = arith.truncf %7 : vector<16x128xf32> to vector<16x128xbf16>
    %c0_6 = arith.constant 0 : index
    %c0_7 = arith.constant 0 : index
    %9 = vector.load %arg4[%c0_6, %c0_7] : memref<128x128xbf16, #tpu.memory_space<vmem>>, vector<128x128xbf16>
    %cst_8 = arith.constant dense<0.000000e+00> : vector<16x128xf32>
    %10 = tpu.matmul %8, %9, %cst_8 {dimension_numbers = #tpu.dot_dimension_numbers<[1], [0], [0], [1], [0, 0, 1, 1], [], []>} : vector<16x128xbf16>, vector<128x128xbf16>, vector<16x128xf32> -> vector<16x128xf32>
    %c0_9 = arith.constant 0 : index
    %c0_10 = arith.constant 0 : index
    %11 = vector.load %arg5[%c0_9, %c0_10] : memref<1x128xf32, #tpu.memory_space<vmem>>, vector<1x128xf32>
    %12 = vector.broadcast %11 : vector<1x128xf32> to vector<16x128xf32>
    %13 = arith.addf %10, %12 : vector<16x128xf32>
    %cst_11 = arith.constant 0.000000e+00 : f32
    %14 = vector.broadcast %cst_11 : f32 to vector<16x128xf32>
    %15 = arith.maximumf %13, %14 : vector<16x128xf32>
    %16 = arith.truncf %15 : vector<16x128xf32> to vector<16x128xbf16>
    %c0_12 = arith.constant 0 : index
    %c0_13 = arith.constant 0 : index
    %17 = vector.load %arg6[%c0_12, %c0_13] : memref<128x128xbf16, #tpu.memory_space<vmem>>, vector<128x128xbf16>
    %cst_14 = arith.constant dense<0.000000e+00> : vector<16x128xf32>
    %18 = tpu.matmul %16, %17, %cst_14 {dimension_numbers = #tpu.dot_dimension_numbers<[1], [0], [0], [1], [0, 0, 1, 1], [], []>} : vector<16x128xbf16>, vector<128x128xbf16>, vector<16x128xf32> -> vector<16x128xf32>
    %c0_15 = arith.constant 0 : index
    %c0_16 = arith.constant 0 : index
    %19 = vector.load %arg7[%c0_15, %c0_16] : memref<1x128xf32, #tpu.memory_space<vmem>>, vector<1x128xf32>
    %20 = vector.broadcast %19 : vector<1x128xf32> to vector<16x128xf32>
    %21 = arith.addf %18, %20 : vector<16x128xf32>
    %cst_17 = arith.constant 0.000000e+00 : f32
    %22 = vector.broadcast %cst_17 : f32 to vector<16x128xf32>
    %23 = arith.maximumf %21, %22 : vector<16x128xf32>
    %24 = arith.truncf %23 : vector<16x128xf32> to vector<16x128xbf16>
    %c0_18 = arith.constant 0 : index
    %c0_19 = arith.constant 0 : index
    %25 = vector.load %arg8[%c0_18, %c0_19] : memref<128x128xbf16, #tpu.memory_space<vmem>>, vector<128x128xbf16>
    %cst_20 = arith.constant dense<0.000000e+00> : vector<16x128xf32>
    %26 = tpu.matmul %24, %25, %cst_20 {dimension_numbers = #tpu.dot_dimension_numbers<[1], [0], [0], [1], [0, 0, 1, 1], [], []>} : vector<16x128xbf16>, vector<128x128xbf16>, vector<16x128xf32> -> vector<16x128xf32>
    %c0_21 = arith.constant 0 : index
    %c0_22 = arith.constant 0 : index
    %27 = vector.load %arg9[%c0_21, %c0_22] : memref<1x128xf32, #tpu.memory_space<vmem>>, vector<1x128xf32>
    %28 = vector.broadcast %27 : vector<1x128xf32> to vector<16x128xf32>
    %29 = arith.addf %26, %28 : vector<16x128xf32>
    %cst_23 = arith.constant 0.000000e+00 : f32
    %30 = vector.broadcast %cst_23 : f32 to vector<16x128xf32>
    %31 = arith.maximumf %29, %30 : vector<16x128xf32>
    %32 = arith.truncf %31 : vector<16x128xf32> to vector<16x128xbf16>
    %c0_24 = arith.constant 0 : index
    %c0_25 = arith.constant 0 : index
    %33 = vector.load %arg10[%c0_24, %c0_25] : memref<128x256xbf16, #tpu.memory_space<vmem>>, vector<128x256xbf16>
    %cst_26 = arith.constant dense<0.000000e+00> : vector<16x256xf32>
    %34 = tpu.matmul %32, %33, %cst_26 {dimension_numbers = #tpu.dot_dimension_numbers<[1], [0], [0], [1], [0, 0, 1, 1], [], []>} : vector<16x128xbf16>, vector<128x256xbf16>, vector<16x256xf32> -> vector<16x256xf32>
    %c0_27 = arith.constant 0 : index
    %c0_28 = arith.constant 0 : index
    %35 = vector.load %arg11[%c0_27, %c0_28] : memref<1x256xf32, #tpu.memory_space<vmem>>, vector<1x256xf32>
    %36 = vector.broadcast %35 : vector<1x256xf32> to vector<16x256xf32>
    %37 = arith.addf %34, %36 : vector<16x256xf32>
    %cst_29 = arith.constant 0.000000e+00 : f32
    %38 = vector.broadcast %cst_29 : f32 to vector<16x256xf32>
    %39 = arith.maximumf %37, %38 : vector<16x256xf32>
    %40 = arith.truncf %39 : vector<16x256xf32> to vector<16x256xbf16>
    %c0_30 = arith.constant 0 : index
    %c0_31 = arith.constant 0 : index
    %41 = vector.load %arg12[%c0_30, %c0_31] : memref<256x256xbf16, #tpu.memory_space<vmem>>, vector<256x256xbf16>
    %cst_32 = arith.constant dense<0.000000e+00> : vector<16x256xf32>
    %42 = tpu.matmul %40, %41, %cst_32 {dimension_numbers = #tpu.dot_dimension_numbers<[1], [0], [0], [1], [0, 0, 1, 1], [], []>} : vector<16x256xbf16>, vector<256x256xbf16>, vector<16x256xf32> -> vector<16x256xf32>
    %c0_33 = arith.constant 0 : index
    %c0_34 = arith.constant 0 : index
    %43 = vector.load %arg13[%c0_33, %c0_34] : memref<1x256xf32, #tpu.memory_space<vmem>>, vector<1x256xf32>
    %44 = vector.broadcast %43 : vector<1x256xf32> to vector<16x256xf32>
    %45 = arith.addf %42, %44 : vector<16x256xf32>
    %cst_35 = arith.constant 0.000000e+00 : f32
    %46 = vector.broadcast %cst_35 : f32 to vector<16x256xf32>
    %47 = arith.maximumf %45, %46 : vector<16x256xf32>
    %48 = arith.truncf %47 : vector<16x256xf32> to vector<16x256xbf16>
    %c0_36 = arith.constant 0 : index
    %c0_37 = arith.constant 0 : index
    %49 = vector.load %arg14[%c0_36, %c0_37] : memref<256x128xbf16, #tpu.memory_space<vmem>>, vector<256x128xbf16>
    %cst_38 = arith.constant dense<0.000000e+00> : vector<16x128xf32>
    %50 = tpu.matmul %48, %49, %cst_38 {dimension_numbers = #tpu.dot_dimension_numbers<[1], [0], [0], [1], [0, 0, 1, 1], [], []>} : vector<16x256xbf16>, vector<256x128xbf16>, vector<16x128xf32> -> vector<16x128xf32>
    %c0_39 = arith.constant 0 : index
    %c0_40 = arith.constant 0 : index
    %51 = vector.load %arg15[%c0_39, %c0_40] : memref<1x128xf32, #tpu.memory_space<vmem>>, vector<1x128xf32>
    %52 = vector.broadcast %51 : vector<1x128xf32> to vector<16x128xf32>
    %53 = arith.addf %50, %52 : vector<16x128xf32>
    %54 = arith.truncf %53 : vector<16x128xf32> to vector<16x128xbf16>
    %c0_41 = arith.constant 0 : index
    %c0_42 = arith.constant 0 : index
    %55 = vector.load %arg16[%c0_41, %c0_42] : memref<16x128xbf16, #tpu.memory_space<vmem>>, vector<16x128xbf16>
    tpu.vector_store %arg16[%c0_41, %c0_42], %54 {strides = array<i32>} : memref<16x128xbf16, #tpu.memory_space<vmem>>, vector<16x128xbf16>,
    return
  }
  func.func @transform_0(%arg0: i32) -> (i32, i32) {
    %c0_i32 = arith.constant 0 : i32
    %c0_i32_0 = arith.constant 0 : i32
    return %arg0, %c0_i32 : i32, i32
  }
  func.func @transform_1(%arg0: i32) -> (i32, i32) {
    %c0_i32 = arith.constant 0 : i32
    %c0_i32_0 = arith.constant 0 : i32
    %c0_i32_1 = arith.constant 0 : i32
    return %c0_i32, %c0_i32_0 : i32, i32
  }
  func.func @transform_2(%arg0: i32) -> (i32, i32) {
    %c0_i32 = arith.constant 0 : i32
    %c0_i32_0 = arith.constant 0 : i32
    %c0_i32_1 = arith.constant 0 : i32
    return %c0_i32, %c0_i32_0 : i32, i32
  }
  func.func @transform_3(%arg0: i32) -> (i32, i32) {
    %c0_i32 = arith.constant 0 : i32
    %c0_i32_0 = arith.constant 0 : i32
    %c0_i32_1 = arith.constant 0 : i32
    return %c0_i32, %c0_i32_0 : i32, i32
  }
  func.func @transform_4(%arg0: i32) -> (i32, i32) {
    %c0_i32 = arith.constant 0 : i32
    %c0_i32_0 = arith.constant 0 : i32
    %c0_i32_1 = arith.constant 0 : i32
    return %c0_i32, %c0_i32_0 : i32, i32
  }
  func.func @transform_5(%arg0: i32) -> (i32, i32) {
    %c0_i32 = arith.constant 0 : i32
    %c0_i32_0 = arith.constant 0 : i32
    %c0_i32_1 = arith.constant 0 : i32
    return %c0_i32, %c0_i32_0 : i32, i32
  }
  func.func @transform_6(%arg0: i32) -> (i32, i32) {
    %c0_i32 = arith.constant 0 : i32
    %c0_i32_0 = arith.constant 0 : i32
    %c0_i32_1 = arith.constant 0 : i32
    return %c0_i32, %c0_i32_0 : i32, i32
  }
  func.func @transform_7(%arg0: i32) -> (i32, i32) {
    %c0_i32 = arith.constant 0 : i32
    %c0_i32_0 = arith.constant 0 : i32
    %c0_i32_1 = arith.constant 0 : i32
    return %c0_i32, %c0_i32_0 : i32, i32
  }
  func.func @transform_8(%arg0: i32) -> (i32, i32) {
    %c0_i32 = arith.constant 0 : i32
    %c0_i32_0 = arith.constant 0 : i32
    %c0_i32_1 = arith.constant 0 : i32
    return %c0_i32, %c0_i32_0 : i32, i32
  }
  func.func @transform_9(%arg0: i32) -> (i32, i32) {
    %c0_i32 = arith.constant 0 : i32
    %c0_i32_0 = arith.constant 0 : i32
    %c0_i32_1 = arith.constant 0 : i32
    return %c0_i32, %c0_i32_0 : i32, i32
  }
  func.func @transform_10(%arg0: i32) -> (i32, i32) {
    %c0_i32 = arith.constant 0 : i32
    %c0_i32_0 = arith.constant 0 : i32
    %c0_i32_1 = arith.constant 0 : i32
    return %c0_i32, %c0_i32_0 : i32, i32
  }
  func.func @transform_11(%arg0: i32) -> (i32, i32) {
    %c0_i32 = arith.constant 0 : i32
    %c0_i32_0 = arith.constant 0 : i32
    %c0_i32_1 = arith.constant 0 : i32
    return %c0_i32, %c0_i32_0 : i32, i32
  }
  func.func @transform_12(%arg0: i32) -> (i32, i32) {
    %c0_i32 = arith.constant 0 : i32
    %c0_i32_0 = arith.constant 0 : i32
    %c0_i32_1 = arith.constant 0 : i32
    return %c0_i32, %c0_i32_0 : i32, i32
  }
  func.func @transform_13(%arg0: i32) -> (i32, i32) {
    %c0_i32 = arith.constant 0 : i32
    %c0_i32_0 = arith.constant 0 : i32
    %c0_i32_1 = arith.constant 0 : i32
    return %c0_i32, %c0_i32_0 : i32, i32
  }
  func.func @transform_14(%arg0: i32) -> (i32, i32) {
    %c0_i32 = arith.constant 0 : i32
    %c0_i32_0 = arith.constant 0 : i32
    %c0_i32_1 = arith.constant 0 : i32
    return %c0_i32, %c0_i32_0 : i32, i32
  }
  func.func @transform_15(%arg0: i32) -> (i32, i32) {
    %c0_i32 = arith.constant 0 : i32
    %c0_i32_0 = arith.constant 0 : i32
    return %arg0, %c0_i32 : i32, i32
  }
}

</mosaic_0001>

<llo_original>
// kernel: tpu_custom_call.1
$region0: #{tpu_custom_call.1}
  #allocation0 [shape = 'u32[]', space=smem, size = 0x4, offset = 0x4, fixed_abs, tag = 'smem constant byte address 0x4 - core index']
  #allocation1 [shape = 'u32[144,128]{1,0:T(1,128)}', space=vmem, size = 0x12000, scoped, tag = 'internal scratch']
  %s0 = inlined_call_operand.hbm [shape: bf16[16,768], index: 0, kind: input, shape index: {}]
  %s1 = inlined_call_operand.hbm [shape: bf16[768,128], index: 1, kind: input, shape index: {}]
  %s2 = inlined_call_operand.vmem [shape: f32[1,128], index: 2, kind: input, shape index: {}]
  %s3 = inlined_call_operand.hbm [shape: bf16[128,128], index: 3, kind: input, shape index: {}]
  %s4 = inlined_call_operand.vmem [shape: f32[1,128], index: 4, kind: input, shape index: {}]
  %s5 = inlined_call_operand.hbm [shape: bf16[128,128], index: 5, kind: input, shape index: {}]
  %s6 = inlined_call_operand.vmem [shape: f32[1,128], index: 6, kind: input, shape index: {}]
  %s7 = inlined_call_operand.hbm [shape: bf16[128,128], index: 7, kind: input, shape index: {}]
  %s8 = inlined_call_operand.vmem [shape: f32[1,128], index: 8, kind: input, shape index: {}]
  %s9 = inlined_call_operand.hbm [shape: bf16[128,256], index: 9, kind: input, shape index: {}]
  %s10 = inlined_call_operand.vmem [shape: f32[1,256], index: 10, kind: input, shape index: {}]
  %s11 = inlined_call_operand.hbm [shape: bf16[256,256], index: 11, kind: input, shape index: {}]
  %s12 = inlined_call_operand.vmem [shape: f32[1,256], index: 12, kind: input, shape index: {}]
  %s13 = inlined_call_operand.hbm [shape: bf16[256,128], index: 13, kind: input, shape index: {}]
  %s14 = inlined_call_operand.vmem [shape: f32[1,128], index: 14, kind: input, shape index: {}]
  %s15 = inlined_call_operand.hbm [shape: bf16[16,128], index: 15, kind: output, shape index: {}]
  %s16 = sld [smem:[#allocation0]]
  $region102: #{tpu_custom_call.1} parent=0
    _
  %s18 = ssub.s32 1, %s16
  %s19 = scalar_select 0, %s18, %s16
  $region1: #{tpu_custom_call.1} parent=0
    #allocation2 [shape = 'u8[24576]{0}', space=vmem, size = 0x6000, scoped, tag = 'input window, operand 0, single buffered']
    #allocation3 [shape = 's32[1]{0}', space=sflag, size = 0x4, scoped, tag = 'scoped memory for tpu_custom_call.1']
    #allocation4 [shape = 's32[1]{0}', space=sflag, size = 0x4, scoped, tag = 'scoped memory for tpu_custom_call.1']
    #allocation5 [shape = 'u8[196608]{0}', space=vmem, size = 0x30000, scoped, tag = 'input window, operand 1, single buffered']
    #allocation6 [shape = 's32[1]{0}', space=sflag, size = 0x4, scoped, tag = 'scoped memory for tpu_custom_call.1']
    #allocation7 [shape = 'u8[32768]{0}', space=vmem, size = 0x8000, scoped, tag = 'input window, operand 3, single buffered']
    #allocation8 [shape = 'u8[32768]{0}', space=vmem, size = 0x8000, scoped, tag = 'input window, operand 5, single buffered']
    #allocation9 [shape = 's32[1]{0}', space=sflag, size = 0x4, scoped, tag = 'scoped memory for tpu_custom_call.1']
    #allocation10 [shape = 'u8[32768]{0}', space=vmem, size = 0x8000, scoped, tag = 'input window, operand 7, single buffered']
    #allocation11 [shape = 'u8[65536]{0}', space=vmem, size = 0x10000, scoped, tag = 'input window, operand 9, single buffered']
    #allocation12 [shape = 's32[1]{0}', space=sflag, size = 0x4, scoped, tag = 'scoped memory for tpu_custom_call.1']
    #allocation13 [shape = 'u8[131072]{0}', space=vmem, size = 0x20000, scoped, tag = 'input window, operand 11, single buffered']
    #allocation14 [shape = 'u8[65536]{0}', space=vmem, size = 0x10000, scoped, tag = 'input window, operand 13, single buffered']
    #allocation15 [shape = 's32[1]{0}', space=sflag, size = 0x4, scoped, tag = 'scoped memory for tpu_custom_call.1']
    #allocation16 [shape = 'u8[4096]{0}', space=vmem, size = 0x1000, scoped, tag = 'output window, operand 0, single buffered']
    %20 = vsyncpa [#allocation3], 0
    %21 = vsyncpa [#allocation6], 0
    %22 = vsyncpa [#allocation9], 0
    %23 = vsyncpa [#allocation12], 0
    %24 = vsyncpa [#allocation15], 0
    %25 = vsyncpa [#allocation4], 0
    // Predicated region
    $region2: #{tpu_custom_call.1} parent=1 // pred_check
      _
    $region3: #{tpu_custom_call.1} parent=1 // pred_check_branch
      %27 = sbr.rel (0) target = $region5
    $region4: #{tpu_custom_call.1} parent=1 // pred_region
      %s29 = ssub.s32 768, 768
      %30 = vsyncadd [#allocation3], %s29
      %s31 = sshll.u32 [#allocation2], 4
      %s32 = int_to_ptr.vmem [resolvable:$true] %s31
      %37 = dma.hbm_to_vmem [thread:$0]  %s0, 768, %s32, [#allocation3], 384, 384, 24
    $region5: #{tpu_custom_call.1} parent=1 // pred_fallthru
      _
    // Predicated region
    $region6: #{tpu_custom_call.1} parent=1 // pred_check
      _
    $region7: #{tpu_custom_call.1} parent=1 // pred_check_branch
      %39 = sbr.rel (0) target = $region9
    $region8: #{tpu_custom_call.1} parent=1 // pred_region
      %s41 = ssub.s32 6144, 6144
      %42 = vsyncadd [#allocation6], %s41
      %s43 = sshll.u32 [#allocation5], 4
      %s44 = int_to_ptr.vmem [resolvable:$true] %s43
      %49 = dma.hbm_to_vmem [thread:$0]  %s1, 6144, %s44, [#allocation6], 64, 64, 4
    $region9: #{tpu_custom_call.1} parent=1 // pred_fallthru
      _
    // Predicated region
    $region10: #{tpu_custom_call.1} parent=1 // pred_check
      _
    $region11: #{tpu_custom_call.1} parent=1 // pred_check_branch
      %51 = sbr.rel (0) target = $region13
    $region12: #{tpu_custom_call.1} parent=1 // pred_region
      _
    $region13: #{tpu_custom_call.1} parent=1 // pred_fallthru
      _
    // Predicated region
    $region14: #{tpu_custom_call.1} parent=1 // pred_check
      _
    $region15: #{tpu_custom_call.1} parent=1 // pred_check_branch
      %53 = sbr.rel (0) target = $region17
    $region16: #{tpu_custom_call.1} parent=1 // pred_region
      %s55 = ssub.s32 1024, 1024
      %56 = vsyncadd [#allocation6], %s55
      %s57 = sshll.u32 [#allocation7], 4
      %s58 = int_to_ptr.vmem [resolvable:$true] %s57
      %63 = dma.hbm_to_vmem [thread:$0]  %s3, 1024, %s58, [#allocation6], 64, 64, 4
    $region17: #{tpu_custom_call.1} parent=1 // pred_fallthru
      _
    // Predicated region
    $region18: #{tpu_custom_call.1} parent=1 // pred_check
      _
    $region19: #{tpu_custom_call.1} parent=1 // pred_check_branch
      %65 = sbr.rel (0) target = $region21
    $region20: #{tpu_custom_call.1} parent=1 // pred_region
      _
    $region21: #{tpu_custom_call.1} parent=1 // pred_fallthru
      _
    // Predicated region
    $region22: #{tpu_custom_call.1} parent=1 // pred_check
      _
    $region23: #{tpu_custom_call.1} parent=1 // pred_check_branch
      %67 = sbr.rel (0) target = $region25
    $region24: #{tpu_custom_call.1} parent=1 // pred_region
      %s69 = ssub.s32 1024, 1024
      %70 = vsyncadd [#allocation9], %s69
      %s71 = sshll.u32 [#allocation8], 4
      %s72 = int_to_ptr.vmem [resolvable:$true] %s71
      %77 = dma.hbm_to_vmem [thread:$0]  %s5, 1024, %s72, [#allocation9], 64, 64, 4
    $region25: #{tpu_custom_call.1} parent=1 // pred_fallthru
      _
    // Predicated region
    $region26: #{tpu_custom_call.1} parent=1 // pred_check
      _
    $region27: #{tpu_custom_call.1} parent=1 // pred_check_branch
      %79 = sbr.rel (0) target = $region29
    $region28: #{tpu_custom_call.1} parent=1 // pred_region
      _
    $region29: #{tpu_custom_call.1} parent=1 // pred_fallthru
      _
    // Predicated region
    $region30: #{tpu_custom_call.1} parent=1 // pred_check
      _
    $region31: #{tpu_custom_call.1} parent=1 // pred_check_branch
      %81 = sbr.rel (0) target = $region33
    $region32: #{tpu_custom_call.1} parent=1 // pred_region
      %s83 = ssub.s32 1024, 1024
      %84 = vsyncadd [#allocation9], %s83
      %s85 = sshll.u32 [#allocation10], 4
      %s86 = int_to_ptr.vmem [resolvable:$true] %s85
      %91 = dma.hbm_to_vmem [thread:$0]  %s7, 1024, %s86, [#allocation9], 64, 64, 4
    $region33: #{tpu_custom_call.1} parent=1 // pred_fallthru
      _
    // Predicated region
    $region34: #{tpu_custom_call.1} parent=1 // pred_check
      _
    $region35: #{tpu_custom_call.1} parent=1 // pred_check_branch
      %93 = sbr.rel (0) target = $region37
    $region36: #{tpu_custom_call.1} parent=1 // pred_region
      _
    $region37: #{tpu_custom_call.1} parent=1 // pred_fallthru
      _
    // Predicated region
    $region38: #{tpu_custom_call.1} parent=1 // pred_check
      _
    $region39: #{tpu_custom_call.1} parent=1 // pred_check_branch
      %95 = sbr.rel (0) target = $region41
    $region40: #{tpu_custom_call.1} parent=1 // pred_region
      %s97 = ssub.s32 2048, 2048
      %98 = vsyncadd [#allocation12], %s97
      %s99 = sshll.u32 [#allocation11], 4
      %s100 = int_to_ptr.vmem [resolvable:$true] %s99
      %105 = dma.hbm_to_vmem [thread:$0]  %s9, 2048, %s100, [#allocation12], 128, 128, 8
    $region41: #{tpu_custom_call.1} parent=1 // pred_fallthru
      _
    // Predicated region
    $region42: #{tpu_custom_call.1} parent=1 // pred_check
      _
    $region43: #{tpu_custom_call.1} parent=1 // pred_check_branch
      %107 = sbr.rel (0) target = $region45
    $region44: #{tpu_custom_call.1} parent=1 // pred_region
      _
    $region45: #{tpu_custom_call.1} parent=1 // pred_fallthru
      _
    // Predicated region
    $region46: #{tpu_custom_call.1} parent=1 // pred_check
      _
    $region47: #{tpu_custom_call.1} parent=1 // pred_check_branch
      %109 = sbr.rel (0) target = $region49
    $region48: #{tpu_custom_call.1} parent=1 // pred_region
      %s111 = ssub.s32 4096, 4096
      %112 = vsyncadd [#allocation12], %s111
      %s113 = sshll.u32 [#allocation13], 4
      %s114 = int_to_ptr.vmem [resolvable:$true] %s113
      %119 = dma.hbm_to_vmem [thread:$0]  %s11, 4096, %s114, [#allocation12], 128, 128, 8
    $region49: #{tpu_custom_call.1} parent=1 // pred_fallthru
      _
    // Predicated region
    $region50: #{tpu_custom_call.1} parent=1 // pred_check
      _
    $region51: #{tpu_custom_call.1} parent=1 // pred_check_branch
      %121 = sbr.rel (0) target = $region53
    $region52: #{tpu_custom_call.1} parent=1 // pred_region
      _
    $region53: #{tpu_custom_call.1} parent=1 // pred_fallthru
      _
    // Predicated region
    $region54: #{tpu_custom_call.1} parent=1 // pred_check
      _
    $region55: #{tpu_custom_call.1} parent=1 // pred_check_branch
      %123 = sbr.rel (0) target = $region57
    $region56: #{tpu_custom_call.1} parent=1 // pred_region
      %s125 = ssub.s32 2048, 2048
      %126 = vsyncadd [#allocation15], %s125
      %s127 = sshll.u32 [#allocation14], 4
      %s128 = int_to_ptr.vmem [resolvable:$true] %s127
      %133 = dma.hbm_to_vmem [thread:$0]  %s13, 2048, %s128, [#allocation15], 64, 64, 4
    $region57: #{tpu_custom_call.1} parent=1 // pred_fallthru
      _
    // Predicated region
    $region58: #{tpu_custom_call.1} parent=1 // pred_check
      _
    $region59: #{tpu_custom_call.1} parent=1 // pred_check_branch
      %135 = sbr.rel (0) target = $region61
    $region60: #{tpu_custom_call.1} parent=1 // pred_region
      _
    $region61: #{tpu_custom_call.1} parent=1 // pred_fallthru
      _
    // Predicated region
    $region62: #{tpu_custom_call.1} parent=1 // pred_check
      _
    $region63: #{tpu_custom_call.1} parent=1 // pred_check_branch
      %137 = sbr.rel (0) target = $region65
    $region64: #{tpu_custom_call.1} parent=1 // pred_region
      %138 = dma.done [#allocation3], 768
    $region65: #{tpu_custom_call.1} parent=1 // pred_fallthru
      _
    // Predicated region
    $region66: #{tpu_custom_call.1} parent=1 // pred_check
      _
    $region67: #{tpu_custom_call.1} parent=1 // pred_check_branch
      %140 = sbr.rel (0) target = $region69
    $region68: #{tpu_custom_call.1} parent=1 // pred_region
      %141 = dma.done [#allocation6], 6144
    $region69: #{tpu_custom_call.1} parent=1 // pred_fallthru
      _
    // Predicated region
    $region70: #{tpu_custom_call.1} parent=1 // pred_check
      _
    $region71: #{tpu_custom_call.1} parent=1 // pred_check_branch
      %143 = sbr.rel (0) target = $region73
    $region72: #{tpu_custom_call.1} parent=1 // pred_region
      %144 = dma.done [#allocation6], 1024
    $region73: #{tpu_custom_call.1} parent=1 // pred_fallthru
      _
    // Predicated region
    $region74: #{tpu_custom_call.1} parent=1 // pred_check
      _
    $region75: #{tpu_custom_call.1} parent=1 // pred_check_branch
      %146 = sbr.rel (0) target = $region77
    $region76: #{tpu_custom_call.1} parent=1 // pred_region
      %147 = dma.done [#allocation9], 1024
    $region77: #{tpu_custom_call.1} parent=1 // pred_fallthru
      _
    // Predicated region
    $region78: #{tpu_custom_call.1} parent=1 // pred_check
      _
    $region79: #{tpu_custom_call.1} parent=1 // pred_check_branch
      %149 = sbr.rel (0) target = $region81
    $region80: #{tpu_custom_call.1} parent=1 // pred_region
      %150 = dma.done [#allocation9], 1024
    $region81: #{tpu_custom_call.1} parent=1 // pred_fallthru
      _
    // Predicated region
    $region82: #{tpu_custom_call.1} parent=1 // pred_check
      _
    $region83: #{tpu_custom_call.1} parent=1 // pred_check_branch
      %152 = sbr.rel (0) target = $region85
    $region84: #{tpu_custom_call.1} parent=1 // pred_region
      %153 = dma.done [#allocation12], 2048
    $region85: #{tpu_custom_call.1} parent=1 // pred_fallthru
      _
    // Predicated region
    $region86: #{tpu_custom_call.1} parent=1 // pred_check
      _
    $region87: #{tpu_custom_call.1} parent=1 // pred_check_branch
      %155 = sbr.rel (0) target = $region89
    $region88: #{tpu_custom_call.1} parent=1 // pred_region
      %156 = dma.done [#allocation12], 4096
    $region89: #{tpu_custom_call.1} parent=1 // pred_fallthru
      _
    // Predicated region
    $region90: #{tpu_custom_call.1} parent=1 // pred_check
      _
    $region91: #{tpu_custom_call.1} parent=1 // pred_check_branch
      %158 = sbr.rel (0) target = $region93
    $region92: #{tpu_custom_call.1} parent=1 // pred_region
      %159 = dma.done [#allocation15], 2048
    $region93: #{tpu_custom_call.1} parent=1 // pred_fallthru
      _
    %v161 = vld [vmem:[#allocation2] sm:$0xff]
    %v162 = vld [vmem:[#allocation2 + $0x8] sm:$0xff]
    %v163 = vld [vmem:[#allocation2 + $0x10] sm:$0xff]
    %v164 = vld [vmem:[#allocation2 + $0x18] sm:$0xff]
    %v165 = vld [vmem:[#allocation2 + $0x20] sm:$0xff]
    %v166 = vld [vmem:[#allocation2 + $0x28] sm:$0xff]
    %v167 = vld [vmem:[#allocation5] sm:$0xf]
    %v168 = vld [vmem:[#allocation5 + $0x4] sm:$0xf]
    %v169 = vld [vmem:[#allocation5 + $0x8] sm:$0xf]
    %v170 = vld [vmem:[#allocation5 + $0xc] sm:$0xf]
    %v171 = vld [vmem:[#allocation5 + $0x10] sm:$0xf]
    %v172 = vld [vmem:[#allocation5 + $0x14] sm:$0xf]
    %v173 = vld [vmem:[#allocation5 + $0x18] sm:$0xf]
    %v174 = vld [vmem:[#allocation5 + $0x1c] sm:$0xf]
    %v175 = vld [vmem:[#allocation5 + $0x20] sm:$0xf]
    %v176 = vld [vmem:[#allocation5 + $0x24] sm:$0xf]
    %v177 = vld [vmem:[#allocation5 + $0x28] sm:$0xf]
    %v178 = vld [vmem:[#allocation5 + $0x2c] sm:$0xf]
    %v179 = vld [vmem:[#allocation5 + $0x30] sm:$0xf]
    %v180 = vld [vmem:[#allocation5 + $0x34] sm:$0xf]
    %v181 = vld [vmem:[#allocation5 + $0x38] sm:$0xf]
    %v182 = vld [vmem:[#allocation5 + $0x3c] sm:$0xf]
    %v183 = vld [vmem:[#allocation5 + $0x40] sm:$0xf]
    %v184 = vld [vmem:[#allocation5 + $0x44] sm:$0xf]
    %v185 = vld [vmem:[#allocation5 + $0x48] sm:$0xf]
    %v186 = vld [vmem:[#allocation5 + $0x4c] sm:$0xf]
    %v187 = vld [vmem:[#allocation5 + $0x50] sm:$0xf]
    %v188 = vld [vmem:[#allocation5 + $0x54] sm:$0xf]
    %v189 = vld [vmem:[#allocation5 + $0x58] sm:$0xf]
    %v190 = vld [vmem:[#allocation5 + $0x5c] sm:$0xf]
    %v191 = vld [vmem:[#allocation5 + $0x60] sm:$0xf]
    %v192 = vld [vmem:[#allocation5 + $0x64] sm:$0xf]
    %v193 = vld [vmem:[#allocation5 + $0x68] sm:$0xf]
    %v194 = vld [vmem:[#allocation5 + $0x6c] sm:$0xf]
    %v195 = vld [vmem:[#allocation5 + $0x70] sm:$0xf]
    %v196 = vld [vmem:[#allocation5 + $0x74] sm:$0xf]
    %v197 = vld [vmem:[#allocation5 + $0x78] sm:$0xf]
    %v198 = vld [vmem:[#allocation5 + $0x7c] sm:$0xf]
    %v199 = vld [vmem:[#allocation5 + $0x80] sm:$0xf]
    %v200 = vld [vmem:[#allocation5 + $0x84] sm:$0xf]
    %v201 = vld [vmem:[#allocation5 + $0x88] sm:$0xf]
    %v202 = vld [vmem:[#allocation5 + $0x8c] sm:$0xf]
    %v203 = vld [vmem:[#allocation5 + $0x90] sm:$0xf]
    %v204 = vld [vmem:[#allocation5 + $0x94] sm:$0xf]
    %v205 = vld [vmem:[#allocation5 + $0x98] sm:$0xf]
    %v206 = vld [vmem:[#allocation5 + $0x9c] sm:$0xf]
    %v207 = vld [vmem:[#allocation5 + $0xa0] sm:$0xf]
    %v208 = vld [vmem:[#allocation5 + $0xa4] sm:$0xf]
    %v209 = vld [vmem:[#allocation5 + $0xa8] sm:$0xf]
    %v210 = vld [vmem:[#allocation5 + $0xac] sm:$0xf]
    %v211 = vld [vmem:[#allocation5 + $0xb0] sm:$0xf]
    %v212 = vld [vmem:[#allocation5 + $0xb4] sm:$0xf]
    %v213 = vld [vmem:[#allocation5 + $0xb8] sm:$0xf]
    %v214 = vld [vmem:[#allocation5 + $0xbc] sm:$0xf]
    %v215 = vld [vmem:[#allocation5 + $0xc0] sm:$0xf]
    %v216 = vld [vmem:[#allocation5 + $0xc4] sm:$0xf]
    %v217 = vld [vmem:[#allocation5 + $0xc8] sm:$0xf]
    %v218 = vld [vmem:[#allocation5 + $0xcc] sm:$0xf]
    %v219 = vld [vmem:[#allocation5 + $0xd0] sm:$0xf]
    %v220 = vld [vmem:[#allocation5 + $0xd4] sm:$0xf]
    %v221 = vld [vmem:[#allocation5 + $0xd8] sm:$0xf]
    %v222 = vld [vmem:[#allocation5 + $0xdc] sm:$0xf]
    %v223 = vld [vmem:[#allocation5 + $0xe0] sm:$0xf]
    %v224 = vld [vmem:[#allocation5 + $0xe4] sm:$0xf]
    %v225 = vld [vmem:[#allocation5 + $0xe8] sm:$0xf]
    %v226 = vld [vmem:[#allocation5 + $0xec] sm:$0xf]
    %v227 = vld [vmem:[#allocation5 + $0xf0] sm:$0xf]
    %v228 = vld [vmem:[#allocation5 + $0xf4] sm:$0xf]
    %v229 = vld [vmem:[#allocation5 + $0xf8] sm:$0xf]
    %v230 = vld [vmem:[#allocation5 + $0xfc] sm:$0xf]
    %v231 = vld [vmem:[#allocation5 + $0x100] sm:$0xf]
    %v232 = vld [vmem:[#allocation5 + $0x104] sm:$0xf]
    %v233 = vld [vmem:[#allocation5 + $0x108] sm:$0xf]
    %v234 = vld [vmem:[#allocation5 + $0x10c] sm:$0xf]
    %v235 = vld [vmem:[#allocation5 + $0x110] sm:$0xf]
    %v236 = vld [vmem:[#allocation5 + $0x114] sm:$0xf]
    %v237 = vld [vmem:[#allocation5 + $0x118] sm:$0xf]
    %v238 = vld [vmem:[#allocation5 + $0x11c] sm:$0xf]
    %v239 = vld [vmem:[#allocation5 + $0x120] sm:$0xf]
    %v240 = vld [vmem:[#allocation5 + $0x124] sm:$0xf]
    %v241 = vld [vmem:[#allocation5 + $0x128] sm:$0xf]
    %v242 = vld [vmem:[#allocation5 + $0x12c] sm:$0xf]
    %v243 = vld [vmem:[#allocation5 + $0x130] sm:$0xf]
    %v244 = vld [vmem:[#allocation5 + $0x134] sm:$0xf]
    %v245 = vld [vmem:[#allocation5 + $0x138] sm:$0xf]
    %v246 = vld [vmem:[#allocation5 + $0x13c] sm:$0xf]
    %v247 = vld [vmem:[#allocation5 + $0x140] sm:$0xf]
    %v248 = vld [vmem:[#allocation5 + $0x144] sm:$0xf]
    %v249 = vld [vmem:[#allocation5 + $0x148] sm:$0xf]
    %v250 = vld [vmem:[#allocation5 + $0x14c] sm:$0xf]
    %v251 = vld [vmem:[#allocation5 + $0x150] sm:$0xf]
    %v252 = vld [vmem:[#allocation5 + $0x154] sm:$0xf]
    %v253 = vld [vmem:[#allocation5 + $0x158] sm:$0xf]
    %v254 = vld [vmem:[#allocation5 + $0x15c] sm:$0xf]
    %v255 = vld [vmem:[#allocation5 + $0x160] sm:$0xf]
    %v256 = vld [vmem:[#allocation5 + $0x164] sm:$0xf]
    %v257 = vld [vmem:[#allocation5 + $0x168] sm:$0xf]
    %v258 = vld [vmem:[#allocation5 + $0x16c] sm:$0xf]
    %v259 = vld [vmem:[#allocation5 + $0x170] sm:$0xf]
    %v260 = vld [vmem:[#allocation5 + $0x174] sm:$0xf]
    %v261 = vld [vmem:[#allocation5 + $0x178] sm:$0xf]
    %v262 = vld [vmem:[#allocation5 + $0x17c] sm:$0xf]
    %v263 = vld [vmem:[%s2] sm:$0x1]
    %v265 = vlaneseq
    %v266 = vshrl.u32 %v265, 7
    %v267 = vsub.s32 0, %v266
    %v268 = vrot.slane %v263, %v267
    %v276 = vunpack.c.l.b16 %v161
    %v277 = vunpack.c.h.b16 %v161
    %v278 = vunpack.c.l.b16 %v162
    %v279 = vunpack.c.h.b16 %v162
    %v280 = vunpack.c.l.b16 %v163
    %v281 = vunpack.c.h.b16 %v163
    %v282 = vunpack.c.l.b16 %v164
    %v283 = vunpack.c.h.b16 %v164
    %v284 = vunpack.c.l.b16 %v165
    %v285 = vunpack.c.h.b16 %v165
    %v286 = vunpack.c.l.b16 %v166
    %v287 = vunpack.c.h.b16 %v166
    %v288 = vpack.c.b16 %v282, %v276
    %v289 = vpack.c.b16 %v283, %v277
    %v290 = vpack.c.b16 %v284, %v278
    %v291 = vpack.c.b16 %v285, %v279
    %v292 = vpack.c.b16 %v286, %v280
    %v293 = vpack.c.b16 %v287, %v281
    %v396 = vunpack.c.l.b16 %v167
    %v397 = vunpack.c.l.b16 %v168
    %v398 = vunpack.c.l.b16 %v169
    %v399 = vunpack.c.l.b16 %v170
    %v400 = vunpack.c.l.b16 %v171
    %v401 = vunpack.c.l.b16 %v172
    %v402 = vunpack.c.l.b16 %v173
    %v403 = vunpack.c.l.b16 %v174
    %v404 = vunpack.c.l.b16 %v175
    %v405 = vunpack.c.l.b16 %v176
    %v406 = vunpack.c.l.b16 %v177
    %v407 = vunpack.c.l.b16 %v178
    %v408 = vunpack.c.l.b16 %v179
    %v409 = vunpack.c.l.b16 %v180
    %v410 = vunpack.c.l.b16 %v181
    %v411 = vunpack.c.l.b16 %v182
    %v412 = vunpack.c.l.b16 %v183
    %v413 = vunpack.c.l.b16 %v184
    %v414 = vunpack.c.l.b16 %v185
    %v415 = vunpack.c.l.b16 %v186
    %v416 = vunpack.c.l.b16 %v187
    %v417 = vunpack.c.l.b16 %v188
    %v418 = vunpack.c.l.b16 %v189
    %v419 = vunpack.c.l.b16 %v190
    %v420 = vunpack.c.l.b16 %v191
    %v421 = vunpack.c.l.b16 %v192
    %v422 = vunpack.c.l.b16 %v193
    %v423 = vunpack.c.l.b16 %v194
    %v424 = vunpack.c.l.b16 %v195
    %v425 = vunpack.c.l.b16 %v196
    %v426 = vunpack.c.l.b16 %v197
    %v427 = vunpack.c.l.b16 %v198
    %v428 = vunpack.c.l.b16 %v199
    %v429 = vunpack.c.l.b16 %v200
    %v430 = vunpack.c.l.b16 %v201
    %v431 = vunpack.c.l.b16 %v202
    %v432 = vunpack.c.l.b16 %v203
    %v433 = vunpack.c.l.b16 %v204
    %v434 = vunpack.c.l.b16 %v205
    %v435 = vunpack.c.l.b16 %v206
    %v436 = vunpack.c.l.b16 %v207
    %v437 = vunpack.c.l.b16 %v208
    %v438 = vunpack.c.l.b16 %v209
    %v439 = vunpack.c.l.b16 %v210
    %v440 = vunpack.c.l.b16 %v211
    %v441 = vunpack.c.l.b16 %v212
    %v442 = vunpack.c.l.b16 %v213
    %v443 = vunpack.c.l.b16 %v214
    %v444 = vunpack.c.l.b16 %v215
    %v445 = vunpack.c.l.b16 %v216
    %v446 = vunpack.c.l.b16 %v217
    %v447 = vunpack.c.l.b16 %v218
    %v448 = vunpack.c.l.b16 %v219
    %v449 = vunpack.c.l.b16 %v220
    %v450 = vunpack.c.l.b16 %v221
    %v451 = vunpack.c.l.b16 %v222
    %v452 = vunpack.c.l.b16 %v223
    %v453 = vunpack.c.l.b16 %v224
    %v454 = vunpack.c.l.b16 %v225
    %v455 = vunpack.c.l.b16 %v226
    %v456 = vunpack.c.l.b16 %v227
    %v457 = vunpack.c.l.b16 %v228
    %v458 = vunpack.c.l.b16 %v229
    %v459 = vunpack.c.l.b16 %v230
    %v460 = vunpack.c.l.b16 %v231
    %v461 = vunpack.c.l.b16 %v232
    %v462 = vunpack.c.l.b16 %v233
    %v463 = vunpack.c.l.b16 %v234
    %v464 = vunpack.c.l.b16 %v235
    %v465 = vunpack.c.l.b16 %v236
    %v466 = vunpack.c.l.b16 %v237
    %v467 = vunpack.c.l.b16 %v238
    %v468 = vunpack.c.l.b16 %v239
    %v469 = vunpack.c.l.b16 %v240
    %v470 = vunpack.c.l.b16 %v241
    %v471 = vunpack.c.l.b16 %v242
    %v472 = vunpack.c.l.b16 %v243
    %v473 = vunpack.c.l.b16 %v244
    %v474 = vunpack.c.l.b16 %v245
    %v475 = vunpack.c.l.b16 %v246
    %v476 = vunpack.c.l.b16 %v247
    %v477 = vunpack.c.l.b16 %v248
    %v478 = vunpack.c.l.b16 %v249
    %v479 = vunpack.c.l.b16 %v250
    %v480 = vunpack.c.l.b16 %v251
    %v481 = vunpack.c.l.b16 %v252
    %v482 = vunpack.c.l.b16 %v253
    %v483 = vunpack.c.l.b16 %v254
    %v484 = vunpack.c.l.b16 %v255
    %v485 = vunpack.c.l.b16 %v256
    %v486 = vunpack.c.l.b16 %v257
    %v487 = vunpack.c.l.b16 %v258
    %v488 = vunpack.c.l.b16 %v259
    %v489 = vunpack.c.l.b16 %v260
    %v490 = vunpack.c.l.b16 %v261
    %v491 = vunpack.c.l.b16 %v262
    %v492 = vpack.c.b16 %v397, %v396
    %v493 = vpack.c.b16 %v399, %v398
    %v494 = vpack.c.b16 %v401, %v400
    %v495 = vpack.c.b16 %v403, %v402
    %v496 = vpack.c.b16 %v405, %v404
    %v497 = vpack.c.b16 %v407, %v406
    %v498 = vpack.c.b16 %v409, %v408
    %v499 = vpack.c.b16 %v411, %v410
    %v500 = vpack.c.b16 %v413, %v412
    %v501 = vpack.c.b16 %v415, %v414
    %v502 = vpack.c.b16 %v417, %v416
    %v503 = vpack.c.b16 %v419, %v418
    %v504 = vpack.c.b16 %v421, %v420
    %v505 = vpack.c.b16 %v423, %v422
    %v506 = vpack.c.b16 %v425, %v424
    %v507 = vpack.c.b16 %v427, %v426
    %v508 = vpack.c.b16 %v429, %v428
    %v509 = vpack.c.b16 %v431, %v430
    %v510 = vpack.c.b16 %v433, %v432
    %v511 = vpack.c.b16 %v435, %v434
    %v512 = vpack.c.b16 %v437, %v436
    %v513 = vpack.c.b16 %v439, %v438
    %v514 = vpack.c.b16 %v441, %v440
    %v515 = vpack.c.b16 %v443, %v442
    %v516 = vpack.c.b16 %v445, %v444
    %v517 = vpack.c.b16 %v447, %v446
    %v518 = vpack.c.b16 %v449, %v448
    %v519 = vpack.c.b16 %v451, %v450
    %v520 = vpack.c.b16 %v453, %v452
    %v521 = vpack.c.b16 %v455, %v454
    %v522 = vpack.c.b16 %v457, %v456
    %v523 = vpack.c.b16 %v459, %v458
    %v524 = vpack.c.b16 %v461, %v460
    %v525 = vpack.c.b16 %v463, %v462
    %v526 = vpack.c.b16 %v465, %v464
    %v527 = vpack.c.b16 %v467, %v466
    %v528 = vpack.c.b16 %v469, %v468
    %v529 = vpack.c.b16 %v471, %v470
    %v530 = vpack.c.b16 %v473, %v472
    %v531 = vpack.c.b16 %v475, %v474
    %v532 = vpack.c.b16 %v477, %v476
    %v533 = vpack.c.b16 %v479, %v478
    %v534 = vpack.c.b16 %v481, %v480
    %v535 = vpack.c.b16 %v483, %v482
    %v536 = vpack.c.b16 %v485, %v484
    %v537 = vpack.c.b16 %v487, %v486
    %v538 = vpack.c.b16 %v489, %v488
    %v539 = vpack.c.b16 %v491, %v490
    %588 = vmatprep.subr.bf16.mxu0 0
    %589 = vmatpush1.bf16.msra.mxu0 %v492
    %590 = vmatprep.subr.bf16.mxu0 0
    %591 = vmatpush1.bf16.msra.mxu0 %v493
    %592 = vmatprep.subr.bf16.mxu0 0
    %593 = vmatpush1.bf16.msra.mxu0 %v494
    %594 = vmatprep.subr.bf16.mxu0 0
    %595 = vmatpush1.bf16.msra.mxu0 %v495
    %596 = vmatprep.subr.bf16.mxu0 0
    %597 = vmatpush1.bf16.msra.mxu0 %v496
    %598 = vmatprep.subr.bf16.mxu0 0
    %599 = vmatpush1.bf16.msra.mxu0 %v497
    %600 = vmatprep.subr.bf16.mxu0 0
    %601 = vmatpush1.bf16.msra.mxu0 %v498
    %602 = vmatprep.subr.bf16.mxu0 0
    %603 = vmatpush1.bf16.msra.mxu0 %v499
    %604 = vmatprep.subr.bf16.mxu0 0
    %605 = vmatpush1.bf16.msra.mxu0 %v500
    %606 = vmatprep.subr.bf16.mxu0 0
    %607 = vmatpush1.bf16.msra.mxu0 %v501
    %608 = vmatprep.subr.bf16.mxu0 0
    %609 = vmatpush1.bf16.msra.mxu0 %v502
    %610 = vmatprep.subr.bf16.mxu0 0
    %611 = vmatpush1.bf16.msra.mxu0 %v503
    %612 = vmatprep.subr.bf16.mxu0 0
    %613 = vmatpush1.bf16.msra.mxu0 %v504
    %614 = vmatprep.subr.bf16.mxu0 0
    %615 = vmatpush1.bf16.msra.mxu0 %v505
    %616 = vmatprep.subr.bf16.mxu0 0
    %617 = vmatpush1.bf16.msra.mxu0 %v506
    %618 = vmatprep.subr.bf16.mxu0 0
    %619 = vmatpush1.bf16.msra.mxu0 %v507
    %620 = vmatprep.mubr.bf16.mxu0 %v289
    %621 = vmatmul.mubr.bf16.gmra.mrb[0].mxu0 %v288
    %v622 = vpop.f32.mrb[0].mxu0
    %v623 = vadd.f32 %v268, %v622
    %v624 = vpop.f32.mrb[0].mxu0
    %v625 = vpop.f32.mrb[0].mxu0
    %v626 = vadd.f32 %v268, %v625
    %v627 = vpop.f32.mrb[0].mxu0
    %628 = vdwg.mxu0
    %629 = vmatprep.subr.bf16.mxu0 0
    %630 = vmatpush1.bf16.msra.mxu0 %v508
    %631 = vmatprep.subr.bf16.mxu0 0
    %632 = vmatpush1.bf16.msra.mxu0 %v509
    %633 = vmatprep.subr.bf16.mxu0 0
    %634 = vmatpush1.bf16.msra.mxu0 %v510
    %635 = vmatprep.subr.bf16.mxu0 0
    %636 = vmatpush1.bf16.msra.mxu0 %v511
    %637 = vmatprep.subr.bf16.mxu0 0
    %638 = vmatpush1.bf16.msra.mxu0 %v512
    %639 = vmatprep.subr.bf16.mxu0 0
    %640 = vmatpush1.bf16.msra.mxu0 %v513
    %641 = vmatprep.subr.bf16.mxu0 0
    %642 = vmatpush1.bf16.msra.mxu0 %v514
    %643 = vmatprep.subr.bf16.mxu0 0
    %644 = vmatpush1.bf16.msra.mxu0 %v515
    %645 = vmatprep.subr.bf16.mxu0 0
    %646 = vmatpush1.bf16.msra.mxu0 %v516
    %647 = vmatprep.subr.bf16.mxu0 0
    %648 = vmatpush1.bf16.msra.mxu0 %v517
    %649 = vmatprep.subr.bf16.mxu0 0
    %650 = vmatpush1.bf16.msra.mxu0 %v518
    %651 = vmatprep.subr.bf16.mxu0 0
    %652 = vmatpush1.bf16.msra.mxu0 %v519
    %653 = vmatprep.subr.bf16.mxu0 0
    %654 = vmatpush1.bf16.msra.mxu0 %v520
    %655 = vmatprep.subr.bf16.mxu0 0
    %656 = vmatpush1.bf16.msra.mxu0 %v521
    %657 = vmatprep.subr.bf16.mxu0 0
    %658 = vmatpush1.bf16.msra.mxu0 %v522
    %659 = vmatprep.subr.bf16.mxu0 0
    %660 = vmatpush1.bf16.msra.mxu0 %v523
    %661 = vmatprep.mubr.bf16.mxu0 %v291
    %662 = vmatmul.mubr.bf16.gmra.mrb[0].mxu0 %v290
    %v663 = vpop.f32.mrb[0].mxu0
    %v664 = vadd.f32 %v623, %v663
    %v665 = vpop.f32.mrb[0].mxu0
    %v666 = vpop.f32.mrb[0].mxu0
    %v667 = vadd.f32 %v626, %v666
    %v668 = vpop.f32.mrb[0].mxu0
    %669 = vdwg.mxu0
    %670 = vmatprep.subr.bf16.mxu0 0
    %671 = vmatpush1.bf16.msra.mxu0 %v524
    %672 = vmatprep.subr.bf16.mxu0 0
    %673 = vmatpush1.bf16.msra.mxu0 %v525
    %674 = vmatprep.subr.bf16.mxu0 0
    %675 = vmatpush1.bf16.msra.mxu0 %v526
    %676 = vmatprep.subr.bf16.mxu0 0
    %677 = vmatpush1.bf16.msra.mxu0 %v527
    %678 = vmatprep.subr.bf16.mxu0 0
    %679 = vmatpush1.bf16.msra.mxu0 %v528
    %680 = vmatprep.subr.bf16.mxu0 0
    %681 = vmatpush1.bf16.msra.mxu0 %v529
    %682 = vmatprep.subr.bf16.mxu0 0
    %683 = vmatpush1.bf16.msra.mxu0 %v530
    %684 = vmatprep.subr.bf16.mxu0 0
    %685 = vmatpush1.bf16.msra.mxu0 %v531
    %686 = vmatprep.subr.bf16.mxu0 0
    %687 = vmatpush1.bf16.msra.mxu0 %v532
    %688 = vmatprep.subr.bf16.mxu0 0
    %689 = vmatpush1.bf16.msra.mxu0 %v533
    %690 = vmatprep.subr.bf16.mxu0 0
    %691 = vmatpush1.bf16.msra.mxu0 %v534
    %692 = vmatprep.subr.bf16.mxu0 0
    %693 = vmatpush1.bf16.msra.mxu0 %v535
    %694 = vmatprep.subr.bf16.mxu0 0
    %695 = vmatpush1.bf16.msra.mxu0 %v536
    %696 = vmatprep.subr.bf16.mxu0 0
    %697 = vmatpush1.bf16.msra.mxu0 %v537
    %698 = vmatprep.subr.bf16.mxu0 0
    %699 = vmatpush1.bf16.msra.mxu0 %v538
    %700 = vmatprep.subr.bf16.mxu0 0
    %701 = vmatpush1.bf16.msra.mxu0 %v539
    %702 = vmatprep.mubr.bf16.mxu0 %v293
    %703 = vmatmul.mubr.bf16.gmra.mrb[0].mxu0 %v292
    %v704 = vpop.f32.mrb[0].mxu0
    %v705 = vadd.f32 %v664, %v704
    %v706 = vpop.f32.mrb[0].mxu0
    %v707 = vpop.f32.mrb[0].mxu0
    %v708 = vadd.f32 %v667, %v707
    %v709 = vpop.f32.mrb[0].mxu0
    %710 = vdwg.mxu0
    %v711 = vmax.f32 %v705, 0.0
    %v712 = vmax.f32 %v708, 0.0
    %v713 = vpack.c.bf16 %v712, %v711
    %v714 = vld [vmem:[#allocation7] sm:$0xf]
    %v715 = vld [vmem:[#allocation7 + $0x4] sm:$0xf]
    %v716 = vld [vmem:[#allocation7 + $0x8] sm:$0xf]
    %v717 = vld [vmem:[#allocation7 + $0xc] sm:$0xf]
    %v718 = vld [vmem:[#allocation7 + $0x10] sm:$0xf]
    %v719 = vld [vmem:[#allocation7 + $0x14] sm:$0xf]
    %v720 = vld [vmem:[#allocation7 + $0x18] sm:$0xf]
    %v721 = vld [vmem:[#allocation7 + $0x1c] sm:$0xf]
    %v722 = vld [vmem:[#allocation7 + $0x20] sm:$0xf]
    %v723 = vld [vmem:[#allocation7 + $0x24] sm:$0xf]
    %v724 = vld [vmem:[#allocation7 + $0x28] sm:$0xf]
    %v725 = vld [vmem:[#allocation7 + $0x2c] sm:$0xf]
    %v726 = vld [vmem:[#allocation7 + $0x30] sm:$0xf]
    %v727 = vld [vmem:[#allocation7 + $0x34] sm:$0xf]
    %v728 = vld [vmem:[#allocation7 + $0x38] sm:$0xf]
    %v729 = vld [vmem:[#allocation7 + $0x3c] sm:$0xf]
    %v730 = vld [vmem:[%s4] sm:$0x1]
    %v732 = vlaneseq
    %v733 = vshrl.u32 %v732, 7
    %v734 = vsub.s32 0, %v733
    %v735 = vrot.slane %v730, %v734
    %v753 = vunpack.c.l.b16 %v714
    %v754 = vunpack.c.l.b16 %v715
    %v755 = vunpack.c.l.b16 %v716
    %v756 = vunpack.c.l.b16 %v717
    %v757 = vunpack.c.l.b16 %v718
    %v758 = vunpack.c.l.b16 %v719
    %v759 = vunpack.c.l.b16 %v720
    %v760 = vunpack.c.l.b16 %v721
    %v761 = vunpack.c.l.b16 %v722
    %v762 = vunpack.c.l.b16 %v723
    %v763 = vunpack.c.l.b16 %v724
    %v764 = vunpack.c.l.b16 %v725
    %v765 = vunpack.c.l.b16 %v726
    %v766 = vunpack.c.l.b16 %v727
    %v767 = vunpack.c.l.b16 %v728
    %v768 = vunpack.c.l.b16 %v729
    %v769 = vpack.c.b16 %v754, %v753
    %v770 = vpack.c.b16 %v756, %v755
    %v771 = vpack.c.b16 %v758, %v757
    %v772 = vpack.c.b16 %v760, %v759
    %v773 = vpack.c.b16 %v762, %v761
    %v774 = vpack.c.b16 %v764, %v763
    %v775 = vpack.c.b16 %v766, %v765
    %v776 = vpack.c.b16 %v768, %v767
    %785 = vmatprep.subr.bf16.mxu0 0
    %786 = vmatpush1.bf16.msra.mxu0 %v769
    %787 = vmatprep.subr.bf16.mxu0 0
    %788 = vmatpush1.bf16.msra.mxu0 %v770
    %789 = vmatprep.subr.bf16.mxu0 0
    %790 = vmatpush1.bf16.msra.mxu0 %v771
    %791 = vmatprep.subr.bf16.mxu0 0
    %792 = vmatpush1.bf16.msra.mxu0 %v772
    %793 = vmatprep.subr.bf16.mxu0 0
    %794 = vmatpush1.bf16.msra.mxu0 %v773
    %795 = vmatprep.subr.bf16.mxu0 0
    %796 = vmatpush1.bf16.msra.mxu0 %v774
    %797 = vmatprep.subr.bf16.mxu0 0
    %798 = vmatpush1.bf16.msra.mxu0 %v775
    %799 = vmatprep.subr.bf16.mxu0 0
    %800 = vmatpush1.bf16.msra.mxu0 %v776
    %801 = vmatprep.subr.bf16.mxu0 0
    %802 = vmatpush1.bf16.msra.mxu0 0
    %803 = vmatprep.subr.bf16.mxu0 0
    %804 = vmatpush1.bf16.msra.mxu0 0
    %805 = vmatprep.subr.bf16.mxu0 0
    %806 = vmatpush1.bf16.msra.mxu0 0
    %807 = vmatprep.subr.bf16.mxu0 0
    %808 = vmatpush1.bf16.msra.mxu0 0
    %809 = vmatprep.subr.bf16.mxu0 0
    %810 = vmatpush1.bf16.msra.mxu0 0
    %811 = vmatprep.subr.bf16.mxu0 0
    %812 = vmatpush1.bf16.msra.mxu0 0
    %813 = vmatprep.subr.bf16.mxu0 0
    %814 = vmatpush1.bf16.msra.mxu0 0
    %815 = vmatprep.subr.bf16.mxu0 0
    %816 = vmatpush1.bf16.msra.mxu0 0
    %817 = vmatprep.mubr.bf16.mxu0 0
    %818 = vmatmul.mubr.bf16.gmra.mrb[0].mxu0 %v713
    %v819 = vpop.f32.mrb[0].mxu0
    %v820 = vadd.f32 %v735, %v819
    %v821 = vpop.f32.mrb[0].mxu0
    %v822 = vpop.f32.mrb[0].mxu0
    %v823 = vadd.f32 %v735, %v822
    %v824 = vpop.f32.mrb[0].mxu0
    %825 = vdwg.mxu0
    %v826 = vmax.f32 %v820, 0.0
    %v827 = vmax.f32 %v823, 0.0
    %v828 = vpack.c.bf16 %v827, %v826
    %v829 = vld [vmem:[#allocation8] sm:$0xf]
    %v830 = vld [vmem:[#allocation8 + $0x4] sm:$0xf]
    %v831 = vld [vmem:[#allocation8 + $0x8] sm:$0xf]
    %v832 = vld [vmem:[#allocation8 + $0xc] sm:$0xf]
    %v833 = vld [vmem:[#allocation8 + $0x10] sm:$0xf]
    %v834 = vld [vmem:[#allocation8 + $0x14] sm:$0xf]
    %v835 = vld [vmem:[#allocation8 + $0x18] sm:$0xf]
    %v836 = vld [vmem:[#allocation8 + $0x1c] sm:$0xf]
    %v837 = vld [vmem:[#allocation8 + $0x20] sm:$0xf]
    %v838 = vld [vmem:[#allocation8 + $0x24] sm:$0xf]
    %v839 = vld [vmem:[#allocation8 + $0x28] sm:$0xf]
    %v840 = vld [vmem:[#allocation8 + $0x2c] sm:$0xf]
    %v841 = vld [vmem:[#allocation8 + $0x30] sm:$0xf]
    %v842 = vld [vmem:[#allocation8 + $0x34] sm:$0xf]
    %v843 = vld [vmem:[#allocation8 + $0x38] sm:$0xf]
    %v844 = vld [vmem:[#allocation8 + $0x3c] sm:$0xf]
    %v845 = vld [vmem:[%s6] sm:$0x1]
    %v847 = vlaneseq
    %v848 = vshrl.u32 %v847, 7
    %v849 = vsub.s32 0, %v848
    %v850 = vrot.slane %v845, %v849
    %v868 = vunpack.c.l.b16 %v829
    %v869 = vunpack.c.l.b16 %v830
    %v870 = vunpack.c.l.b16 %v831
    %v871 = vunpack.c.l.b16 %v832
    %v872 = vunpack.c.l.b16 %v833
    %v873 = vunpack.c.l.b16 %v834
    %v874 = vunpack.c.l.b16 %v835
    %v875 = vunpack.c.l.b16 %v836
    %v876 = vunpack.c.l.b16 %v837
    %v877 = vunpack.c.l.b16 %v838
    %v878 = vunpack.c.l.b16 %v839
    %v879 = vunpack.c.l.b16 %v840
    %v880 = vunpack.c.l.b16 %v841
    %v881 = vunpack.c.l.b16 %v842
    %v882 = vunpack.c.l.b16 %v843
    %v883 = vunpack.c.l.b16 %v844
    %v884 = vpack.c.b16 %v869, %v868
    %v885 = vpack.c.b16 %v871, %v870
    %v886 = vpack.c.b16 %v873, %v872
    %v887 = vpack.c.b16 %v875, %v874
    %v888 = vpack.c.b16 %v877, %v876
    %v889 = vpack.c.b16 %v879, %v878
    %v890 = vpack.c.b16 %v881, %v880
    %v891 = vpack.c.b16 %v883, %v882
    %900 = vmatprep.subr.bf16.mxu0 0
    %901 = vmatpush1.bf16.msra.mxu0 %v884
    %902 = vmatprep.subr.bf16.mxu0 0
    %903 = vmatpush1.bf16.msra.mxu0 %v885
    %904 = vmatprep.subr.bf16.mxu0 0
    %905 = vmatpush1.bf16.msra.mxu0 %v886
    %906 = vmatprep.subr.bf16.mxu0 0
    %907 = vmatpush1.bf16.msra.mxu0 %v887
    %908 = vmatprep.subr.bf16.mxu0 0
    %909 = vmatpush1.bf16.msra.mxu0 %v888
    %910 = vmatprep.subr.bf16.mxu0 0
    %911 = vmatpush1.bf16.msra.mxu0 %v889
    %912 = vmatprep.subr.bf16.mxu0 0
    %913 = vmatpush1.bf16.msra.mxu0 %v890
    %914 = vmatprep.subr.bf16.mxu0 0
    %915 = vmatpush1.bf16.msra.mxu0 %v891
    %916 = vmatprep.subr.bf16.mxu0 0
    %917 = vmatpush1.bf16.msra.mxu0 0
    %918 = vmatprep.subr.bf16.mxu0 0
    %919 = vmatpush1.bf16.msra.mxu0 0
    %920 = vmatprep.subr.bf16.mxu0 0
    %921 = vmatpush1.bf16.msra.mxu0 0
    %922 = vmatprep.subr.bf16.mxu0 0
    %923 = vmatpush1.bf16.msra.mxu0 0
    %924 = vmatprep.subr.bf16.mxu0 0
    %925 = vmatpush1.bf16.msra.mxu0 0
    %926 = vmatprep.subr.bf16.mxu0 0
    %927 = vmatpush1.bf16.msra.mxu0 0
    %928 = vmatprep.subr.bf16.mxu0 0
    %929 = vmatpush1.bf16.msra.mxu0 0
    %930 = vmatprep.subr.bf16.mxu0 0
    %931 = vmatpush1.bf16.msra.mxu0 0
    %932 = vmatprep.mubr.bf16.mxu0 0
    %933 = vmatmul.mubr.bf16.gmra.mrb[0].mxu0 %v828
    %v934 = vpop.f32.mrb[0].mxu0
    %v935 = vadd.f32 %v850, %v934
    %v936 = vpop.f32.mrb[0].mxu0
    %v937 = vpop.f32.mrb[0].mxu0
    %v938 = vadd.f32 %v850, %v937
    %v939 = vpop.f32.mrb[0].mxu0
    %940 = vdwg.mxu0
    %v941 = vmax.f32 %v935, 0.0
    %v942 = vmax.f32 %v938, 0.0
    %v943 = vpack.c.bf16 %v942, %v941
    %v944 = vld [vmem:[#allocation10] sm:$0xf]
    %v945 = vld [vmem:[#allocation10 + $0x4] sm:$0xf]
    %v946 = vld [vmem:[#allocation10 + $0x8] sm:$0xf]
    %v947 = vld [vmem:[#allocation10 + $0xc] sm:$0xf]
    %v948 = vld [vmem:[#allocation10 + $0x10] sm:$0xf]
    %v949 = vld [vmem:[#allocation10 + $0x14] sm:$0xf]
    %v950 = vld [vmem:[#allocation10 + $0x18] sm:$0xf]
    %v951 = vld [vmem:[#allocation10 + $0x1c] sm:$0xf]
    %v952 = vld [vmem:[#allocation10 + $0x20] sm:$0xf]
    %v953 = vld [vmem:[#allocation10 + $0x24] sm:$0xf]
    %v954 = vld [vmem:[#allocation10 + $0x28] sm:$0xf]
    %v955 = vld [vmem:[#allocation10 + $0x2c] sm:$0xf]
    %v956 = vld [vmem:[#allocation10 + $0x30] sm:$0xf]
    %v957 = vld [vmem:[#allocation10 + $0x34] sm:$0xf]
    %v958 = vld [vmem:[#allocation10 + $0x38] sm:$0xf]
    %v959 = vld [vmem:[#allocation10 + $0x3c] sm:$0xf]
    %v960 = vld [vmem:[%s8] sm:$0x1]
    %v962 = vlaneseq
    %v963 = vshrl.u32 %v962, 7
    %v964 = vsub.s32 0, %v963
    %v965 = vrot.slane %v960, %v964
    %v983 = vunpack.c.l.b16 %v944
    %v984 = vunpack.c.l.b16 %v945
    %v985 = vunpack.c.l.b16 %v946
    %v986 = vunpack.c.l.b16 %v947
    %v987 = vunpack.c.l.b16 %v948
    %v988 = vunpack.c.l.b16 %v949
    %v989 = vunpack.c.l.b16 %v950
    %v990 = vunpack.c.l.b16 %v951
    %v991 = vunpack.c.l.b16 %v952
    %v992 = vunpack.c.l.b16 %v953
    %v993 = vunpack.c.l.b16 %v954
    %v994 = vunpack.c.l.b16 %v955
    %v995 = vunpack.c.l.b16 %v956
    %v996 = vunpack.c.l.b16 %v957
    %v997 = vunpack.c.l.b16 %v958
    %v998 = vunpack.c.l.b16 %v959
    %v999 = vpack.c.b16 %v984, %v983
    %v1000 = vpack.c.b16 %v986, %v985
    %v1001 = vpack.c.b16 %v988, %v987
    %v1002 = vpack.c.b16 %v990, %v989
    %v1003 = vpack.c.b16 %v992, %v991
    %v1004 = vpack.c.b16 %v994, %v993
    %v1005 = vpack.c.b16 %v996, %v995
    %v1006 = vpack.c.b16 %v998, %v997
    %1015 = vmatprep.subr.bf16.mxu0 0
    %1016 = vmatpush1.bf16.msra.mxu0 %v999
    %1017 = vmatprep.subr.bf16.mxu0 0
    %1018 = vmatpush1.bf16.msra.mxu0 %v1000
    %1019 = vmatprep.subr.bf16.mxu0 0
    %1020 = vmatpush1.bf16.msra.mxu0 %v1001
    %1021 = vmatprep.subr.bf16.mxu0 0
    %1022 = vmatpush1.bf16.msra.mxu0 %v1002
    %1023 = vmatprep.subr.bf16.mxu0 0
    %1024 = vmatpush1.bf16.msra.mxu0 %v1003
    %1025 = vmatprep.subr.bf16.mxu0 0
    %1026 = vmatpush1.bf16.msra.mxu0 %v1004
    %1027 = vmatprep.subr.bf16.mxu0 0
    %1028 = vmatpush1.bf16.msra.mxu0 %v1005
    %1029 = vmatprep.subr.bf16.mxu0 0
    %1030 = vmatpush1.bf16.msra.mxu0 %v1006
    %1031 = vmatprep.subr.bf16.mxu0 0
    %1032 = vmatpush1.bf16.msra.mxu0 0
    %1033 = vmatprep.subr.bf16.mxu0 0
    %1034 = vmatpush1.bf16.msra.mxu0 0
    %1035 = vmatprep.subr.bf16.mxu0 0
    %1036 = vmatpush1.bf16.msra.mxu0 0
    %1037 = vmatprep.subr.bf16.mxu0 0
    %1038 = vmatpush1.bf16.msra.mxu0 0
    %1039 = vmatprep.subr.bf16.mxu0 0
    %1040 = vmatpush1.bf16.msra.mxu0 0
    %1041 = vmatprep.subr.bf16.mxu0 0
    %1042 = vmatpush1.bf16.msra.mxu0 0
    %1043 = vmatprep.subr.bf16.mxu0 0
    %1044 = vmatpush1.bf16.msra.mxu0 0
    %1045 = vmatprep.subr.bf16.mxu0 0
    %1046 = vmatpush1.bf16.msra.mxu0 0
    %1047 = vmatprep.mubr.bf16.mxu0 0
    %1048 = vmatmul.mubr.bf16.gmra.mrb[0].mxu0 %v943
    %v1049 = vpop.f32.mrb[0].mxu0
    %v1050 = vadd.f32 %v965, %v1049
    %v1051 = vpop.f32.mrb[0].mxu0
    %v1052 = vpop.f32.mrb[0].mxu0
    %v1053 = vadd.f32 %v965, %v1052
    %v1054 = vpop.f32.mrb[0].mxu0
    %1055 = vdwg.mxu0
    %v1056 = vmax.f32 %v1050, 0.0
    %v1057 = vmax.f32 %v1053, 0.0
    %v1058 = vpack.c.bf16 %v1057, %v1056
    %v1059 = vld [vmem:[#allocation11] sm:$0xff]
    %v1060 = vld [vmem:[#allocation11 + $0x8] sm:$0xff]
    %v1061 = vld [vmem:[#allocation11 + $0x10] sm:$0xff]
    %v1062 = vld [vmem:[#allocation11 + $0x18] sm:$0xff]
    %v1063 = vld [vmem:[#allocation11 + $0x20] sm:$0xff]
    %v1064 = vld [vmem:[#allocation11 + $0x28] sm:$0xff]
    %v1065 = vld [vmem:[#allocation11 + $0x30] sm:$0xff]
    %v1066 = vld [vmem:[#allocation11 + $0x38] sm:$0xff]
    %v1067 = vld [vmem:[#allocation11 + $0x40] sm:$0xff]
    %v1068 = vld [vmem:[#allocation11 + $0x48] sm:$0xff]
    %v1069 = vld [vmem:[#allocation11 + $0x50] sm:$0xff]
    %v1070 = vld [vmem:[#allocation11 + $0x58] sm:$0xff]
    %v1071 = vld [vmem:[#allocation11 + $0x60] sm:$0xff]
    %v1072 = vld [vmem:[#allocation11 + $0x68] sm:$0xff]
    %v1073 = vld [vmem:[#allocation11 + $0x70] sm:$0xff]
    %v1074 = vld [vmem:[#allocation11 + $0x78] sm:$0xff]
    %v1075 = vld [vmem:[%s10] sm:$0x3]
    %v1077 = vlaneseq
    %v1078 = vshrl.u32 %v1077, 7
    %v1079 = vsub.s32 0, %v1078
    %v1080 = vrot.slane %v1075, %v1079
    %v1081 = vlaneseq
    %v1082 = vshrl.u32 %v1081, 7
    %v1083 = vsub.s32 1, %v1082
    %v1084 = vrot.slane %v1075, %v1083
    %v1103 = vunpack.c.l.b16 %v1059
    %v1104 = vunpack.c.h.b16 %v1059
    %v1105 = vunpack.c.l.b16 %v1060
    %v1106 = vunpack.c.h.b16 %v1060
    %v1107 = vunpack.c.l.b16 %v1061
    %v1108 = vunpack.c.h.b16 %v1061
    %v1109 = vunpack.c.l.b16 %v1062
    %v1110 = vunpack.c.h.b16 %v1062
    %v1111 = vunpack.c.l.b16 %v1063
    %v1112 = vunpack.c.h.b16 %v1063
    %v1113 = vunpack.c.l.b16 %v1064
    %v1114 = vunpack.c.h.b16 %v1064
    %v1115 = vunpack.c.l.b16 %v1065
    %v1116 = vunpack.c.h.b16 %v1065
    %v1117 = vunpack.c.l.b16 %v1066
    %v1118 = vunpack.c.h.b16 %v1066
    %v1119 = vunpack.c.l.b16 %v1067
    %v1120 = vunpack.c.h.b16 %v1067
    %v1121 = vunpack.c.l.b16 %v1068
    %v1122 = vunpack.c.h.b16 %v1068
    %v1123 = vunpack.c.l.b16 %v1069
    %v1124 = vunpack.c.h.b16 %v1069
    %v1125 = vunpack.c.l.b16 %v1070
    %v1126 = vunpack.c.h.b16 %v1070
    %v1127 = vunpack.c.l.b16 %v1071
    %v1128 = vunpack.c.h.b16 %v1071
    %v1129 = vunpack.c.l.b16 %v1072
    %v1130 = vunpack.c.h.b16 %v1072
    %v1131 = vunpack.c.l.b16 %v1073
    %v1132 = vunpack.c.h.b16 %v1073
    %v1133 = vunpack.c.l.b16 %v1074
    %v1134 = vunpack.c.h.b16 %v1074
    %v1135 = vpack.c.b16 %v1105, %v1103
    %v1136 = vpack.c.b16 %v1106, %v1104
    %v1137 = vpack.c.b16 %v1109, %v1107
    %v1138 = vpack.c.b16 %v1110, %v1108
    %v1139 = vpack.c.b16 %v1113, %v1111
    %v1140 = vpack.c.b16 %v1114, %v1112
    %v1141 = vpack.c.b16 %v1117, %v1115
    %v1142 = vpack.c.b16 %v1118, %v1116
    %v1143 = vpack.c.b16 %v1121, %v1119
    %v1144 = vpack.c.b16 %v1122, %v1120
    %v1145 = vpack.c.b16 %v1125, %v1123
    %v1146 = vpack.c.b16 %v1126, %v1124
    %v1147 = vpack.c.b16 %v1129, %v1127
    %v1148 = vpack.c.b16 %v1130, %v1128
    %v1149 = vpack.c.b16 %v1133, %v1131
    %v1150 = vpack.c.b16 %v1134, %v1132
    %1167 = vmatprep.subr.bf16.mxu0 %v1136
    %1168 = vmatpush1.bf16.msra.mxu0 %v1135
    %1169 = vmatprep.subr.bf16.mxu0 %v1138
    %1170 = vmatpush1.bf16.msra.mxu0 %v1137
    %1171 = vmatprep.subr.bf16.mxu0 %v1140
    %1172 = vmatpush1.bf16.msra.mxu0 %v1139
    %1173 = vmatprep.subr.bf16.mxu0 %v1142
    %1174 = vmatpush1.bf16.msra.mxu0 %v1141
    %1175 = vmatprep.subr.bf16.mxu0 %v1144
    %1176 = vmatpush1.bf16.msra.mxu0 %v1143
    %1177 = vmatprep.subr.bf16.mxu0 %v1146
    %1178 = vmatpush1.bf16.msra.mxu0 %v1145
    %1179 = vmatprep.subr.bf16.mxu0 %v1148
    %1180 = vmatpush1.bf16.msra.mxu0 %v1147
    %1181 = vmatprep.subr.bf16.mxu0 %v1150
    %1182 = vmatpush1.bf16.msra.mxu0 %v1149
    %1183 = vmatprep.subr.bf16.mxu0 0
    %1184 = vmatpush1.bf16.msra.mxu0 0
    %1185 = vmatprep.subr.bf16.mxu0 0
    %1186 = vmatpush1.bf16.msra.mxu0 0
    %1187 = vmatprep.subr.bf16.mxu0 0
    %1188 = vmatpush1.bf16.msra.mxu0 0
    %1189 = vmatprep.subr.bf16.mxu0 0
    %1190 = vmatpush1.bf16.msra.mxu0 0
    %1191 = vmatprep.subr.bf16.mxu0 0
    %1192 = vmatpush1.bf16.msra.mxu0 0
    %1193 = vmatprep.subr.bf16.mxu0 0
    %1194 = vmatpush1.bf16.msra.mxu0 0
    %1195 = vmatprep.subr.bf16.mxu0 0
    %1196 = vmatpush1.bf16.msra.mxu0 0
    %1197 = vmatprep.subr.bf16.mxu0 0
    %1198 = vmatpush1.bf16.msra.mxu0 0
    %1199 = vmatprep.mubr.bf16.mxu0 0
    %1200 = vmatmul.mubr.bf16.gmra.mrb[0].mxu0 %v1058
    %v1201 = vpop.f32.mrb[0].mxu0
    %v1202 = vadd.f32 %v1080, %v1201
    %v1203 = vpop.f32.mrb[0].mxu0
    %v1204 = vadd.f32 %v1084, %v1203
    %v1205 = vpop.f32.mrb[0].mxu0
    %v1206 = vadd.f32 %v1080, %v1205
    %v1207 = vpop.f32.mrb[0].mxu0
    %v1208 = vadd.f32 %v1084, %v1207
    %1209 = vdwg.mxu0
    %v1210 = vmax.f32 %v1202, 0.0
    %v1211 = vmax.f32 %v1204, 0.0
    %v1212 = vmax.f32 %v1206, 0.0
    %v1213 = vmax.f32 %v1208, 0.0
    %v1214 = vpack.c.bf16 %v1212, %v1210
    %v1215 = vpack.c.bf16 %v1213, %v1211
    %v1216 = vld [vmem:[#allocation13] sm:$0xff]
    %v1217 = vld [vmem:[#allocation13 + $0x8] sm:$0xff]
    %v1218 = vld [vmem:[#allocation13 + $0x10] sm:$0xff]
    %v1219 = vld [vmem:[#allocation13 + $0x18] sm:$0xff]
    %v1220 = vld [vmem:[#allocation13 + $0x20] sm:$0xff]
    %v1221 = vld [vmem:[#allocation13 + $0x28] sm:$0xff]
    %v1222 = vld [vmem:[#allocation13 + $0x30] sm:$0xff]
    %v1223 = vld [vmem:[#allocation13 + $0x38] sm:$0xff]
    %v1224 = vld [vmem:[#allocation13 + $0x40] sm:$0xff]
    %v1225 = vld [vmem:[#allocation13 + $0x48] sm:$0xff]
    %v1226 = vld [vmem:[#allocation13 + $0x50] sm:$0xff]
    %v1227 = vld [vmem:[#allocation13 + $0x58] sm:$0xff]
    %v1228 = vld [vmem:[#allocation13 + $0x60] sm:$0xff]
    %v1229 = vld [vmem:[#allocation13 + $0x68] sm:$0xff]
    %v1230 = vld [vmem:[#allocation13 + $0x70] sm:$0xff]
    %v1231 = vld [vmem:[#allocation13 + $0x78] sm:$0xff]
    %v1232 = vld [vmem:[#allocation13 + $0x80] sm:$0xff]
    %v1233 = vld [vmem:[#allocation13 + $0x88] sm:$0xff]
    %v1234 = vld [vmem:[#allocation13 + $0x90] sm:$0xff]
    %v1235 = vld [vmem:[#allocation13 + $0x98] sm:$0xff]
    %v1236 = vld [vmem:[#allocation13 + $0xa0] sm:$0xff]
    %v1237 = vld [vmem:[#allocation13 + $0xa8] sm:$0xff]
    %v1238 = vld [vmem:[#allocation13 + $0xb0] sm:$0xff]
    %v1239 = vld [vmem:[#allocation13 + $0xb8] sm:$0xff]
    %v1240 = vld [vmem:[#allocation13 + $0xc0] sm:$0xff]
    %v1241 = vld [vmem:[#allocation13 + $0xc8] sm:$0xff]
    %v1242 = vld [vmem:[#allocation13 + $0xd0] sm:$0xff]
    %v1243 = vld [vmem:[#allocation13 + $0xd8] sm:$0xff]
    %v1244 = vld [vmem:[#allocation13 + $0xe0] sm:$0xff]
    %v1245 = vld [vmem:[#allocation13 + $0xe8] sm:$0xff]
    %v1246 = vld [vmem:[#allocation13 + $0xf0] sm:$0xff]
    %v1247 = vld [vmem:[#allocation13 + $0xf8] sm:$0xff]
    %v1248 = vld [vmem:[%s12] sm:$0x3]
    %v1250 = vlaneseq
    %v1251 = vshrl.u32 %v1250, 7
    %v1252 = vsub.s32 0, %v1251
    %v1253 = vrot.slane %v1248, %v1252
    %v1254 = vlaneseq
    %v1255 = vshrl.u32 %v1254, 7
    %v1256 = vsub.s32 1, %v1255
    %v1257 = vrot.slane %v1248, %v1256
    %v1292 = vunpack.c.l.b16 %v1216
    %v1293 = vunpack.c.h.b16 %v1216
    %v1294 = vunpack.c.l.b16 %v1217
    %v1295 = vunpack.c.h.b16 %v1217
    %v1296 = vunpack.c.l.b16 %v1218
    %v1297 = vunpack.c.h.b16 %v1218
    %v1298 = vunpack.c.l.b16 %v1219
    %v1299 = vunpack.c.h.b16 %v1219
    %v1300 = vunpack.c.l.b16 %v1220
    %v1301 = vunpack.c.h.b16 %v1220
    %v1302 = vunpack.c.l.b16 %v1221
    %v1303 = vunpack.c.h.b16 %v1221
    %v1304 = vunpack.c.l.b16 %v1222
    %v1305 = vunpack.c.h.b16 %v1222
    %v1306 = vunpack.c.l.b16 %v1223
    %v1307 = vunpack.c.h.b16 %v1223
    %v1308 = vunpack.c.l.b16 %v1224
    %v1309 = vunpack.c.h.b16 %v1224
    %v1310 = vunpack.c.l.b16 %v1225
    %v1311 = vunpack.c.h.b16 %v1225
    %v1312 = vunpack.c.l.b16 %v1226
    %v1313 = vunpack.c.h.b16 %v1226
    %v1314 = vunpack.c.l.b16 %v1227
    %v1315 = vunpack.c.h.b16 %v1227
    %v1316 = vunpack.c.l.b16 %v1228
    %v1317 = vunpack.c.h.b16 %v1228
    %v1318 = vunpack.c.l.b16 %v1229
    %v1319 = vunpack.c.h.b16 %v1229
    %v1320 = vunpack.c.l.b16 %v1230
    %v1321 = vunpack.c.h.b16 %v1230
    %v1322 = vunpack.c.l.b16 %v1231
    %v1323 = vunpack.c.h.b16 %v1231
    %v1324 = vunpack.c.l.b16 %v1232
    %v1325 = vunpack.c.h.b16 %v1232
    %v1326 = vunpack.c.l.b16 %v1233
    %v1327 = vunpack.c.h.b16 %v1233
    %v1328 = vunpack.c.l.b16 %v1234
    %v1329 = vunpack.c.h.b16 %v1234
    %v1330 = vunpack.c.l.b16 %v1235
    %v1331 = vunpack.c.h.b16 %v1235
    %v1332 = vunpack.c.l.b16 %v1236
    %v1333 = vunpack.c.h.b16 %v1236
    %v1334 = vunpack.c.l.b16 %v1237
    %v1335 = vunpack.c.h.b16 %v1237
    %v1336 = vunpack.c.l.b16 %v1238
    %v1337 = vunpack.c.h.b16 %v1238
    %v1338 = vunpack.c.l.b16 %v1239
    %v1339 = vunpack.c.h.b16 %v1239
    %v1340 = vunpack.c.l.b16 %v1240
    %v1341 = vunpack.c.h.b16 %v1240
    %v1342 = vunpack.c.l.b16 %v1241
    %v1343 = vunpack.c.h.b16 %v1241
    %v1344 = vunpack.c.l.b16 %v1242
    %v1345 = vunpack.c.h.b16 %v1242
    %v1346 = vunpack.c.l.b16 %v1243
    %v1347 = vunpack.c.h.b16 %v1243
    %v1348 = vunpack.c.l.b16 %v1244
    %v1349 = vunpack.c.h.b16 %v1244
    %v1350 = vunpack.c.l.b16 %v1245
    %v1351 = vunpack.c.h.b16 %v1245
    %v1352 = vunpack.c.l.b16 %v1246
    %v1353 = vunpack.c.h.b16 %v1246
    %v1354 = vunpack.c.l.b16 %v1247
    %v1355 = vunpack.c.h.b16 %v1247
    %v1356 = vpack.c.b16 %v1294, %v1292
    %v1357 = vpack.c.b16 %v1295, %v1293
    %v1358 = vpack.c.b16 %v1298, %v1296
    %v1359 = vpack.c.b16 %v1299, %v1297
    %v1360 = vpack.c.b16 %v1302, %v1300
    %v1361 = vpack.c.b16 %v1303, %v1301
    %v1362 = vpack.c.b16 %v1306, %v1304
    %v1363 = vpack.c.b16 %v1307, %v1305
    %v1364 = vpack.c.b16 %v1310, %v1308
    %v1365 = vpack.c.b16 %v1311, %v1309
    %v1366 = vpack.c.b16 %v1314, %v1312
    %v1367 = vpack.c.b16 %v1315, %v1313
    %v1368 = vpack.c.b16 %v1318, %v1316
    %v1369 = vpack.c.b16 %v1319, %v1317
    %v1370 = vpack.c.b16 %v1322, %v1320
    %v1371 = vpack.c.b16 %v1323, %v1321
    %v1372 = vpack.c.b16 %v1326, %v1324
    %v1373 = vpack.c.b16 %v1327, %v1325
    %v1374 = vpack.c.b16 %v1330, %v1328
    %v1375 = vpack.c.b16 %v1331, %v1329
    %v1376 = vpack.c.b16 %v1334, %v1332
    %v1377 = vpack.c.b16 %v1335, %v1333
    %v1378 = vpack.c.b16 %v1338, %v1336
    %v1379 = vpack.c.b16 %v1339, %v1337
    %v1380 = vpack.c.b16 %v1342, %v1340
    %v1381 = vpack.c.b16 %v1343, %v1341
    %v1382 = vpack.c.b16 %v1346, %v1344
    %v1383 = vpack.c.b16 %v1347, %v1345
    %v1384 = vpack.c.b16 %v1350, %v1348
    %v1385 = vpack.c.b16 %v1351, %v1349
    %v1386 = vpack.c.b16 %v1354, %v1352
    %v1387 = vpack.c.b16 %v1355, %v1353
    %1420 = vmatprep.subr.bf16.mxu0 %v1357
    %1421 = vmatpush1.bf16.msra.mxu0 %v1356
    %1422 = vmatprep.subr.bf16.mxu0 %v1359
    %1423 = vmatpush1.bf16.msra.mxu0 %v1358
    %1424 = vmatprep.subr.bf16.mxu0 %v1361
    %1425 = vmatpush1.bf16.msra.mxu0 %v1360
    %1426 = vmatprep.subr.bf16.mxu0 %v1363
    %1427 = vmatpush1.bf16.msra.mxu0 %v1362
    %1428 = vmatprep.subr.bf16.mxu0 %v1365
    %1429 = vmatpush1.bf16.msra.mxu0 %v1364
    %1430 = vmatprep.subr.bf16.mxu0 %v1367
    %1431 = vmatpush1.bf16.msra.mxu0 %v1366
    %1432 = vmatprep.subr.bf16.mxu0 %v1369
    %1433 = vmatpush1.bf16.msra.mxu0 %v1368
    %1434 = vmatprep.subr.bf16.mxu0 %v1371
    %1435 = vmatpush1.bf16.msra.mxu0 %v1370
    %1436 = vmatprep.subr.bf16.mxu0 %v1373
    %1437 = vmatpush1.bf16.msra.mxu0 %v1372
    %1438 = vmatprep.subr.bf16.mxu0 %v1375
    %1439 = vmatpush1.bf16.msra.mxu0 %v1374
    %1440 = vmatprep.subr.bf16.mxu0 %v1377
    %1441 = vmatpush1.bf16.msra.mxu0 %v1376
    %1442 = vmatprep.subr.bf16.mxu0 %v1379
    %1443 = vmatpush1.bf16.msra.mxu0 %v1378
    %1444 = vmatprep.subr.bf16.mxu0 %v1381
    %1445 = vmatpush1.bf16.msra.mxu0 %v1380
    %1446 = vmatprep.subr.bf16.mxu0 %v1383
    %1447 = vmatpush1.bf16.msra.mxu0 %v1382
    %1448 = vmatprep.subr.bf16.mxu0 %v1385
    %1449 = vmatpush1.bf16.msra.mxu0 %v1384
    %1450 = vmatprep.subr.bf16.mxu0 %v1387
    %1451 = vmatpush1.bf16.msra.mxu0 %v1386
    %1452 = vmatprep.mubr.bf16.mxu0 %v1215
    %1453 = vmatmul.mubr.bf16.gmra.mrb[0].mxu0 %v1214
    %v1454 = vpop.f32.mrb[0].mxu0
    %v1455 = vadd.f32 %v1253, %v1454
    %v1456 = vpop.f32.mrb[0].mxu0
    %v1457 = vadd.f32 %v1257, %v1456
    %v1458 = vpop.f32.mrb[0].mxu0
    %v1459 = vadd.f32 %v1253, %v1458
    %v1460 = vpop.f32.mrb[0].mxu0
    %v1461 = vadd.f32 %v1257, %v1460
    %1462 = vdwg.mxu0
    %v1463 = vmax.f32 %v1455, 0.0
    %v1464 = vmax.f32 %v1457, 0.0
    %v1465 = vmax.f32 %v1459, 0.0
    %v1466 = vmax.f32 %v1461, 0.0
    %v1467 = vpack.c.bf16 %v1465, %v1463
    %v1468 = vpack.c.bf16 %v1466, %v1464
    %v1469 = vld [vmem:[#allocation14] sm:$0xf]
    %v1470 = vld [vmem:[#allocation14 + $0x4] sm:$0xf]
    %v1471 = vld [vmem:[#allocation14 + $0x8] sm:$0xf]
    %v1472 = vld [vmem:[#allocation14 + $0xc] sm:$0xf]
    %v1473 = vld [vmem:[#allocation14 + $0x10] sm:$0xf]
    %v1474 = vld [vmem:[#allocation14 + $0x14] sm:$0xf]
    %v1475 = vld [vmem:[#allocation14 + $0x18] sm:$0xf]
    %v1476 = vld [vmem:[#allocation14 + $0x1c] sm:$0xf]
    %v1477 = vld [vmem:[#allocation14 + $0x20] sm:$0xf]
    %v1478 = vld [vmem:[#allocation14 + $0x24] sm:$0xf]
    %v1479 = vld [vmem:[#allocation14 + $0x28] sm:$0xf]
    %v1480 = vld [vmem:[#allocation14 + $0x2c] sm:$0xf]
    %v1481 = vld [vmem:[#allocation14 + $0x30] sm:$0xf]
    %v1482 = vld [vmem:[#allocation14 + $0x34] sm:$0xf]
    %v1483 = vld [vmem:[#allocation14 + $0x38] sm:$0xf]
    %v1484 = vld [vmem:[#allocation14 + $0x3c] sm:$0xf]
    %v1485 = vld [vmem:[#allocation14 + $0x40] sm:$0xf]
    %v1486 = vld [vmem:[#allocation14 + $0x44] sm:$0xf]
    %v1487 = vld [vmem:[#allocation14 + $0x48] sm:$0xf]
    %v1488 = vld [vmem:[#allocation14 + $0x4c] sm:$0xf]
    %v1489 = vld [vmem:[#allocation14 + $0x50] sm:$0xf]
    %v1490 = vld [vmem:[#allocation14 + $0x54] sm:$0xf]
    %v1491 = vld [vmem:[#allocation14 + $0x58] sm:$0xf]
    %v1492 = vld [vmem:[#allocation14 + $0x5c] sm:$0xf]
    %v1493 = vld [vmem:[#allocation14 + $0x60] sm:$0xf]
    %v1494 = vld [vmem:[#allocation14 + $0x64] sm:$0xf]
    %v1495 = vld [vmem:[#allocation14 + $0x68] sm:$0xf]
    %v1496 = vld [vmem:[#allocation14 + $0x6c] sm:$0xf]
    %v1497 = vld [vmem:[#allocation14 + $0x70] sm:$0xf]
    %v1498 = vld [vmem:[#allocation14 + $0x74] sm:$0xf]
    %v1499 = vld [vmem:[#allocation14 + $0x78] sm:$0xf]
    %v1500 = vld [vmem:[#allocation14 + $0x7c] sm:$0xf]
    %v1501 = vld [vmem:[%s14] sm:$0x1]
    %v1503 = vlaneseq
    %v1504 = vshrl.u32 %v1503, 7
    %v1505 = vsub.s32 0, %v1504
    %v1506 = vrot.slane %v1501, %v1505
    %v1540 = vunpack.c.l.b16 %v1469
    %v1541 = vunpack.c.l.b16 %v1470
    %v1542 = vunpack.c.l.b16 %v1471
    %v1543 = vunpack.c.l.b16 %v1472
    %v1544 = vunpack.c.l.b16 %v1473
    %v1545 = vunpack.c.l.b16 %v1474
    %v1546 = vunpack.c.l.b16 %v1475
    %v1547 = vunpack.c.l.b16 %v1476
    %v1548 = vunpack.c.l.b16 %v1477
    %v1549 = vunpack.c.l.b16 %v1478
    %v1550 = vunpack.c.l.b16 %v1479
    %v1551 = vunpack.c.l.b16 %v1480
    %v1552 = vunpack.c.l.b16 %v1481
    %v1553 = vunpack.c.l.b16 %v1482
    %v1554 = vunpack.c.l.b16 %v1483
    %v1555 = vunpack.c.l.b16 %v1484
    %v1556 = vunpack.c.l.b16 %v1485
    %v1557 = vunpack.c.l.b16 %v1486
    %v1558 = vunpack.c.l.b16 %v1487
    %v1559 = vunpack.c.l.b16 %v1488
    %v1560 = vunpack.c.l.b16 %v1489
    %v1561 = vunpack.c.l.b16 %v1490
    %v1562 = vunpack.c.l.b16 %v1491
    %v1563 = vunpack.c.l.b16 %v1492
    %v1564 = vunpack.c.l.b16 %v1493
    %v1565 = vunpack.c.l.b16 %v1494
    %v1566 = vunpack.c.l.b16 %v1495
    %v1567 = vunpack.c.l.b16 %v1496
    %v1568 = vunpack.c.l.b16 %v1497
    %v1569 = vunpack.c.l.b16 %v1498
    %v1570 = vunpack.c.l.b16 %v1499
    %v1571 = vunpack.c.l.b16 %v1500
    %v1572 = vpack.c.b16 %v1541, %v1540
    %v1573 = vpack.c.b16 %v1543, %v1542
    %v1574 = vpack.c.b16 %v1545, %v1544
    %v1575 = vpack.c.b16 %v1547, %v1546
    %v1576 = vpack.c.b16 %v1549, %v1548
    %v1577 = vpack.c.b16 %v1551, %v1550
    %v1578 = vpack.c.b16 %v1553, %v1552
    %v1579 = vpack.c.b16 %v1555, %v1554
    %v1580 = vpack.c.b16 %v1557, %v1556
    %v1581 = vpack.c.b16 %v1559, %v1558
    %v1582 = vpack.c.b16 %v1561, %v1560
    %v1583 = vpack.c.b16 %v1563, %v1562
    %v1584 = vpack.c.b16 %v1565, %v1564
    %v1585 = vpack.c.b16 %v1567, %v1566
    %v1586 = vpack.c.b16 %v1569, %v1568
    %v1587 = vpack.c.b16 %v1571, %v1570
    %1604 = vmatprep.subr.bf16.mxu0 0
    %1605 = vmatpush1.bf16.msra.mxu0 %v1572
    %1606 = vmatprep.subr.bf16.mxu0 0
    %1607 = vmatpush1.bf16.msra.mxu0 %v1573
    %1608 = vmatprep.subr.bf16.mxu0 0
    %1609 = vmatpush1.bf16.msra.mxu0 %v1574
    %1610 = vmatprep.subr.bf16.mxu0 0
    %1611 = vmatpush1.bf16.msra.mxu0 %v1575
    %1612 = vmatprep.subr.bf16.mxu0 0
    %1613 = vmatpush1.bf16.msra.mxu0 %v1576
    %1614 = vmatprep.subr.bf16.mxu0 0
    %1615 = vmatpush1.bf16.msra.mxu0 %v1577
    %1616 = vmatprep.subr.bf16.mxu0 0
    %1617 = vmatpush1.bf16.msra.mxu0 %v1578
    %1618 = vmatprep.subr.bf16.mxu0 0
    %1619 = vmatpush1.bf16.msra.mxu0 %v1579
    %1620 = vmatprep.subr.bf16.mxu0 0
    %1621 = vmatpush1.bf16.msra.mxu0 %v1580
    %1622 = vmatprep.subr.bf16.mxu0 0
    %1623 = vmatpush1.bf16.msra.mxu0 %v1581
    %1624 = vmatprep.subr.bf16.mxu0 0
    %1625 = vmatpush1.bf16.msra.mxu0 %v1582
    %1626 = vmatprep.subr.bf16.mxu0 0
    %1627 = vmatpush1.bf16.msra.mxu0 %v1583
    %1628 = vmatprep.subr.bf16.mxu0 0
    %1629 = vmatpush1.bf16.msra.mxu0 %v1584
    %1630 = vmatprep.subr.bf16.mxu0 0
    %1631 = vmatpush1.bf16.msra.mxu0 %v1585
    %1632 = vmatprep.subr.bf16.mxu0 0
    %1633 = vmatpush1.bf16.msra.mxu0 %v1586
    %1634 = vmatprep.subr.bf16.mxu0 0
    %1635 = vmatpush1.bf16.msra.mxu0 %v1587
    %1636 = vmatprep.mubr.bf16.mxu0 %v1468
    %1637 = vmatmul.mubr.bf16.gmra.mrb[0].mxu0 %v1467
    %v1638 = vpop.f32.mrb[0].mxu0
    %v1639 = vadd.f32 %v1506, %v1638
    %v1640 = vpop.f32.mrb[0].mxu0
    %v1641 = vpop.f32.mrb[0].mxu0
    %v1642 = vadd.f32 %v1506, %v1641
    %v1643 = vpop.f32.mrb[0].mxu0
    %1644 = vdwg.mxu0
    %v1645 = vpack.c.bf16 %v1642, %v1639
    %v1647 = vunpack.c.l.b16 %v1645
    %v1648 = vunpack.c.h.b16 %v1645
    %v1649 = vpack.c.b16 %v1647, %v1647
    %v1650 = vpack.c.b16 %v1648, %v1648
    %1653 = vst [vmem:[#allocation16] sm:$0xf] %v1649
    %1654 = vst [vmem:[#allocation16 + $0x4] sm:$0xf] %v1650
    // Predicated region
    $region94: #{tpu_custom_call.1} parent=1 // pred_check
      _
    $region95: #{tpu_custom_call.1} parent=1 // pred_check_branch
      %1656 = sbr.rel (0) target = $region97
    $region96: #{tpu_custom_call.1} parent=1 // pred_region
      %s1658 = ssub.s32 128, 128
      %1659 = vsyncadd [#allocation4], %s1658
      %s1660 = sshll.u32 [#allocation16], 4
      %s1661 = int_to_ptr.vmem [resolvable:$true] %s1660
      %1666 = dma.vmem_to_hbm [thread:$0]  %s1661, 128, %s15, [#allocation4], 64, 64, 4
    $region97: #{tpu_custom_call.1} parent=1 // pred_fallthru
      _
    // Predicated region
    $region98: #{tpu_custom_call.1} parent=1 // pred_check
      _
    $region99: #{tpu_custom_call.1} parent=1 // pred_check_branch
      %1668 = sbr.rel (0) target = $region101
    $region100: #{tpu_custom_call.1} parent=1 // pred_region
      %1669 = dma.done [#allocation4], 128
    $region101: #{tpu_custom_call.1} parent=1 // pred_fallthru
      _
    %1670 = vsyncpa [#allocation3], 1
    %1671 = vsyncpa [#allocation6], 1
    %1672 = vsyncpa [#allocation9], 1
    %1673 = vsyncpa [#allocation12], 1
    %1674 = vsyncpa [#allocation15], 1
    %1675 = vsyncpa [#allocation4], 1

</llo_original>
